<compile_context>
chip_gen: v6e
topology: v6e:2x2x1
jax: 0.10.0
libtpu: 0.0.40
codegen_flags: <defaults>
</compile_context>

<pallas_src>
import functools

import jax
import jax.numpy as jnp
from jax.experimental import pallas as pl
from jax.experimental.pallas import tpu as pltpu


def _elr_kernel(idx_ref,        # SMEM (B,) int32            scalar prefetch
                logits_ref,     # VMEM (TILE_B, C)           logits tile
                label_ref,      # VMEM (TILE_B, 1) int32     labels tile
                tgt_hbm,        # ANY  (num_examp, C)        persistent target (read)
                loss_ref,       # VMEM (TILE_B, 1) f32       per-row loss partial (out)
                new_tgt_hbm,    # ANY  (num_examp, C)        aliased target (write)
                rows_vmem,      # VMEM (TILE_B, C)           gathered target rows
                in_sems,        # DMA sems (TILE_B,)
                out_sems,       # DMA sems (TILE_B,)
                *, beta, lmbda, tile_b):
    i = pl.program_id(0)
    base = i * tile_b
    row_ids = [idx_ref[base + r] for r in range(tile_b)]

    # ---- in-kernel gather: DMA this tile's scattered target rows into VMEM ----
    gathers = []
    for r in range(tile_b):
        cp = pltpu.make_async_copy(tgt_hbm.at[pl.ds(row_ids[r], 1), :],
                                   rows_vmem.at[pl.ds(r, 1), :],
                                   in_sems.at[r])
        cp.start()
        gathers.append(cp)
    for cp in gathers:
        cp.wait()

    logits = logits_ref[...].astype(jnp.float32)          # cast in-kernel (VPU, free)
    tb, nc = logits.shape

    # --- softmax over classes (dim=1); divides -> EUP approx reciprocals ---
    m = jnp.max(logits, axis=1, keepdims=True)            # (TILE_B, 1)
    ex = jnp.exp(logits - m)                               # (TILE_B, C)
    denom = jnp.sum(ex, axis=1, keepdims=True)             # (TILE_B, 1)
    y_pred = ex * pl.reciprocal(denom, approx=True)
    y_pred = jnp.clip(y_pred, 1e-4, 1.0 - 1e-4)

    # --- temporal-ensembling target update (detached values) ---
    y_norm = y_pred * pl.reciprocal(jnp.sum(y_pred, axis=1, keepdims=True),
                                    approx=True)
    new_rows = beta * rows_vmem[...].astype(jnp.float32) + (1.0 - beta) * y_norm
    rows_vmem[...] = new_rows.astype(rows_vmem.dtype)       # scatter source

    # --- cross entropy per row (== F.cross_entropy before the batch mean) ---
    cls_ids = jax.lax.broadcasted_iota(jnp.int32, (tb, nc), 1)
    label_logit = jnp.sum(jnp.where(cls_ids == label_ref[...], logits, 0.0),
                          axis=1, keepdims=True)            # (TILE_B, 1)
    ce = (jnp.log(denom) + m) - label_logit                 # logsumexp - logit[label]

    # --- ELR regularizer per row: log(1 - <target_new, y_pred>) ---
    dot = jnp.sum(new_rows * y_pred, axis=1, keepdims=True)
    elr = jnp.log(1.0 - dot)

    loss_ref[...] = ce + lmbda * elr                        # per-row partials

    # ---- in-kernel scatter: write back ONLY the touched rows (aliased out) ----
    scatters = []
    for r in range(tile_b):
        cp = pltpu.make_async_copy(rows_vmem.at[pl.ds(r, 1), :],
                                   new_tgt_hbm.at[pl.ds(row_ids[r], 1), :],
                                   out_sems.at[r])
        cp.start()
        scatters.append(cp)
    for cp in scatters:
        cp.wait()


def _pick_tile_b(batch, num_classes, itemsize, cap=256,
                 vmem_budget=8 * 1024 * 1024):
    """Largest divisor of `batch` <= cap that keeps ~8 (tile_b, C) buffers in VMEM."""
    divisors = [t for t in range(1, batch + 1)
                if batch % t == 0 and t <= cap
                and t * num_classes * itemsize * 8 <= vmem_budget]
    if not divisors:
        return 1
    nice = [t for t in divisors if t % 8 == 0 or t == batch]
    return max(nice) if nice else max(divisors)


def elr_forward(output, label, index, target, *, lmbda=0.5, beta=0.7,
                tile_b=None):
    """Functional ELR.forward: returns (final_loss, updated_target)."""
    B, C = output.shape
    num_examp, C2 = target.shape
    assert C == C2, "target / num_classes mismatch"

    if tile_b is None:
        tile_b = _pick_tile_b(B, C, jnp.dtype(target.dtype).itemsize)
    # TODO(synk): mask partial tiles (zero ce/elr rows + conditional scatter DMA)
    # instead of requiring tile_b | B.
    assert B % tile_b == 0, "batch must be divisible by tile_b"
    num_tiles = B // tile_b

    label2d = label.astype(jnp.int32).reshape(B, 1)
    index_i32 = index.astype(jnp.int32)

    kernel = functools.partial(_elr_kernel, beta=float(beta),
                               lmbda=float(lmbda), tile_b=int(tile_b))

    grid_spec = pltpu.PrefetchScalarGridSpec(
        num_scalar_prefetch=1,                               # `index` -> SMEM
        grid=(num_tiles,),
        in_specs=[
            pl.BlockSpec((tile_b, C), lambda i, idx: (i, 0)),    # logits tile
            pl.BlockSpec((tile_b, 1), lambda i, idx: (i, 0)),    # labels tile
            pl.BlockSpec(memory_space=pl.ANY),                   # target stays in HBM
        ],
        out_specs=(
            pl.BlockSpec((tile_b, 1), lambda i, idx: (i, 0)),    # per-row loss
            pl.BlockSpec(memory_space=pl.ANY),                   # aliased target
        ),
        scratch_shapes=[
            pltpu.VMEM((tile_b, C), target.dtype),               # gathered rows
            pltpu.SemaphoreType.DMA((tile_b,)),                  # gather sems
            pltpu.SemaphoreType.DMA((tile_b,)),                  # scatter sems
        ],
    )

    out_isz = jnp.dtype(output.dtype).itemsize
    tgt_isz = jnp.dtype(target.dtype).itemsize
    cost = pl.CostEstimate(
        flops=12 * B * C,
        transcendentals=B * C + 4 * B,
        bytes_accessed=B * C * out_isz + 2 * B * C * tgt_isz + 8 * B)

    loss_rows, new_target = pl.pallas_call(
        kernel,
        out_shape=(
            jax.ShapeDtypeStruct((B, 1), jnp.float32),
            jax.ShapeDtypeStruct((num_examp, C), target.dtype),
        ),
        grid_spec=grid_spec,
        # flat inputs are (index, logits, labels, target) -> alias target to out 1
        input_output_aliases={3: 1},
        compiler_params=pltpu.CompilerParams(
            dimension_semantics=("parallel",),
            vmem_limit_bytes=32 * 1024 * 1024),
        cost_estimate=cost,
    )(index_i32, output, label2d, target)

    return jnp.mean(loss_rows), new_target


def _elr_reference(output, label, index, target, *, lmbda=0.5, beta=0.7):
    """Pure-JAX reference (exact arithmetic) of the PyTorch ELR.forward."""
    B = output.shape[0]
    y = jax.nn.softmax(output.astype(jnp.float32), axis=1)
    y = jnp.clip(y, 1e-4, 1.0 - 1e-4)
    yn = y / jnp.sum(y, axis=1, keepdims=True)
    rows = beta * target[index].astype(jnp.float32) + (1.0 - beta) * yn
    new_target = target.at[index].set(rows.astype(target.dtype))
    ce = jnp.mean(jax.nn.logsumexp(output.astype(jnp.float32), axis=1)
                  - output[jnp.arange(B), label].astype(jnp.float32))
    elr = jnp.mean(jnp.log(1.0 - jnp.sum(rows * y, axis=1)))
    return ce + lmbda * elr, new_target


if __name__ == "__main__":
    key = jax.random.PRNGKey(0)
    k1, k2, k3, k4, k5, k6 = jax.random.split(key, 6)

    num_examp, num_classes, batch = 64, 4, 16

    # Deterministic synthetic inputs; target initialized to zeros like the
    # PyTorch module __init__.  Two chained steps exercise a non-zero target
    # and the in-place (aliased) row scatter.
    target0 = jnp.zeros((num_examp, num_classes), jnp.float32)

    out1 = jax.random.normal(k1, (batch, num_classes), jnp.float32)
    lbl1 = jax.random.randint(k2, (batch,), 0, num_classes, dtype=jnp.int32)
    idx1 = jax.random.permutation(k3, num_examp)[:batch]

    out2 = jax.random.normal(k4, (batch, num_classes), jnp.float32)
    lbl2 = jax.random.randint(k5, (batch,), 0, num_classes, dtype=jnp.int32)
    idx2 = jax.random.permutation(k6, num_examp)[:batch]

    loss1, tgt1 = elr_forward(out1, lbl1, idx1, target0,
                              lmbda=0.5, beta=0.7, tile_b=8)   # 2 grid steps
    loss2, tgt2 = elr_forward(out2, lbl2, idx2, tgt1,
                              lmbda=0.5, beta=0.7, tile_b=8)
    jax.block_until_ready((loss1, loss2, tgt2))

    # Pure-JAX reference chain.
    rt0 = jnp.zeros((num_examp, num_classes), jnp.float32)
    rl1, rt1 = _elr_reference(out1, lbl1, idx1, rt0, lmbda=0.5, beta=0.7)
    rl2, rt2 = _elr_reference(out2, lbl2, idx2, rt1, lmbda=0.5, beta=0.7)

    # Approx reciprocals (EUP) introduce ~1e-3-level differences; tolerances
    # are loosened accordingly while still validating the math.
    assert jnp.allclose(loss1, rl1, rtol=1e-2, atol=1e-2), (loss1, rl1)
    assert jnp.allclose(loss2, rl2, rtol=1e-2, atol=1e-2), (loss2, rl2)
    assert jnp.allclose(tgt2, rt2, rtol=1e-2, atol=5e-3)

    print("KERNEL_OK")
</pallas_src>

<mosaic_0001>
module attributes {stable_mosaic.version = 11 : i64} {
  func.func @_elr_kernel(%arg0: i32, %arg1: memref<16xi32, #tpu.memory_space<smem>>, %arg2: memref<8x4xf32, #tpu.memory_space<vmem>>, %arg3: memref<8x1xi32, #tpu.memory_space<vmem>>, %arg4: memref<64x4xf32, #tpu.memory_space<any>>, %arg5: memref<8x1xf32, #tpu.memory_space<vmem>>, %arg6: memref<64x4xf32, #tpu.memory_space<any>>, %arg7: memref<8x4xf32, #tpu.memory_space<vmem>>, %arg8: memref<8x!tpu.dma_semaphore, #tpu.memory_space<semaphore_mem>>, %arg9: memref<8x!tpu.dma_semaphore, #tpu.memory_space<semaphore_mem>>) attributes {dimension_semantics = [#tpu.dimension_semantics<parallel>], iteration_bounds = array<i64: 2>, scalar_prefetch = 1 : i64, scratch_operands = 3 : i64, tpu.core_type = #tpu.core_type<tc>, window_params = [{transform_indices = @transform_0, window_bounds = array<i64: 8, 4>}, {transform_indices = @transform_1, window_bounds = array<i64: 8, 1>}, {}, {transform_indices = @transform_3, window_bounds = array<i64: 8, 1>}, {}]} {
    %c8_i32 = arith.constant 8 : i32
    %0 = arith.muli %arg0, %c8_i32 : i32
    %c0_i32 = arith.constant 0 : i32
    %1 = arith.addi %0, %c0_i32 : i32
    %2 = arith.index_cast %1 : i32 to index
    %3 = memref.load %arg1[%2] : memref<16xi32, #tpu.memory_space<smem>>
    %c1_i32 = arith.constant 1 : i32
    %4 = arith.addi %0, %c1_i32 : i32
    %5 = arith.index_cast %4 : i32 to index
    %6 = memref.load %arg1[%5] : memref<16xi32, #tpu.memory_space<smem>>
    %c2_i32 = arith.constant 2 : i32
    %7 = arith.addi %0, %c2_i32 : i32
    %8 = arith.index_cast %7 : i32 to index
    %9 = memref.load %arg1[%8] : memref<16xi32, #tpu.memory_space<smem>>
    %c3_i32 = arith.constant 3 : i32
    %10 = arith.addi %0, %c3_i32 : i32
    %11 = arith.index_cast %10 : i32 to index
    %12 = memref.load %arg1[%11] : memref<16xi32, #tpu.memory_space<smem>>
    %c4_i32 = arith.constant 4 : i32
    %13 = arith.addi %0, %c4_i32 : i32
    %14 = arith.index_cast %13 : i32 to index
    %15 = memref.load %arg1[%14] : memref<16xi32, #tpu.memory_space<smem>>
    %c5_i32 = arith.constant 5 : i32
    %16 = arith.addi %0, %c5_i32 : i32
    %17 = arith.index_cast %16 : i32 to index
    %18 = memref.load %arg1[%17] : memref<16xi32, #tpu.memory_space<smem>>
    %c6_i32 = arith.constant 6 : i32
    %19 = arith.addi %0, %c6_i32 : i32
    %20 = arith.index_cast %19 : i32 to index
    %21 = memref.load %arg1[%20] : memref<16xi32, #tpu.memory_space<smem>>
    %c7_i32 = arith.constant 7 : i32
    %22 = arith.addi %0, %c7_i32 : i32
    %23 = arith.index_cast %22 : i32 to index
    %24 = memref.load %arg1[%23] : memref<16xi32, #tpu.memory_space<smem>>
    %c0_i32_0 = arith.constant 0 : i32
    %c0_i32_1 = arith.constant 0 : i32
    %25 = tpu.memref_slice %arg4[%3, %c0_i32_1] : memref<64x4xf32, #tpu.memory_space<any>> -> memref<1x4xf32, #tpu.memory_space<any>>
    %c0_i32_2 = arith.constant 0 : i32
    %c0_i32_3 = arith.constant 0 : i32
    %26 = tpu.memref_slice %arg7[%c0_i32_2, %c0_i32_3] : memref<8x4xf32, #tpu.memory_space<vmem>> -> memref<1x4xf32, #tpu.memory_space<vmem>>
    %27 = tpu.memref_slice %arg8[%c0_i32_0] : memref<8x!tpu.dma_semaphore, #tpu.memory_space<semaphore_mem>> -> memref<1x!tpu.dma_semaphore, #tpu.memory_space<semaphore_mem>>
    %28 = tpu.memref_squeeze %27 : memref<1x!tpu.dma_semaphore, #tpu.memory_space<semaphore_mem>> -> memref<!tpu.dma_semaphore, #tpu.memory_space<semaphore_mem>>
    tpu.enqueue_dma source(%25 : memref<1x4xf32, #tpu.memory_space<any>>) target(%26 : memref<1x4xf32, #tpu.memory_space<vmem>>) target_semaphore(%28 : memref<!tpu.dma_semaphore, #tpu.memory_space<semaphore_mem>>)
    %c1_i32_4 = arith.constant 1 : i32
    %c0_i32_5 = arith.constant 0 : i32
    %29 = tpu.memref_slice %arg4[%6, %c0_i32_5] : memref<64x4xf32, #tpu.memory_space<any>> -> memref<1x4xf32, #tpu.memory_space<any>>
    %c1_i32_6 = arith.constant 1 : i32
    %c0_i32_7 = arith.constant 0 : i32
    %30 = tpu.memref_slice %arg7[%c1_i32_6, %c0_i32_7] : memref<8x4xf32, #tpu.memory_space<vmem>> -> memref<1x4xf32, #tpu.memory_space<vmem>>
    %31 = tpu.memref_slice %arg8[%c1_i32_4] : memref<8x!tpu.dma_semaphore, #tpu.memory_space<semaphore_mem>> -> memref<1x!tpu.dma_semaphore, #tpu.memory_space<semaphore_mem>>
    %32 = tpu.memref_squeeze %31 : memref<1x!tpu.dma_semaphore, #tpu.memory_space<semaphore_mem>> -> memref<!tpu.dma_semaphore, #tpu.memory_space<semaphore_mem>>
    tpu.enqueue_dma source(%29 : memref<1x4xf32, #tpu.memory_space<any>>) target(%30 : memref<1x4xf32, #tpu.memory_space<vmem>>) target_semaphore(%32 : memref<!tpu.dma_semaphore, #tpu.memory_space<semaphore_mem>>)
    %c2_i32_8 = arith.constant 2 : i32
    %c0_i32_9 = arith.constant 0 : i32
    %33 = tpu.memref_slice %arg4[%9, %c0_i32_9] : memref<64x4xf32, #tpu.memory_space<any>> -> memref<1x4xf32, #tpu.memory_space<any>>
    %c2_i32_10 = arith.constant 2 : i32
    %c0_i32_11 = arith.constant 0 : i32
    %34 = tpu.memref_slice %arg7[%c2_i32_10, %c0_i32_11] : memref<8x4xf32, #tpu.memory_space<vmem>> -> memref<1x4xf32, #tpu.memory_space<vmem>>
    %35 = tpu.memref_slice %arg8[%c2_i32_8] : memref<8x!tpu.dma_semaphore, #tpu.memory_space<semaphore_mem>> -> memref<1x!tpu.dma_semaphore, #tpu.memory_space<semaphore_mem>>
    %36 = tpu.memref_squeeze %35 : memref<1x!tpu.dma_semaphore, #tpu.memory_space<semaphore_mem>> -> memref<!tpu.dma_semaphore, #tpu.memory_space<semaphore_mem>>
    tpu.enqueue_dma source(%33 : memref<1x4xf32, #tpu.memory_space<any>>) target(%34 : memref<1x4xf32, #tpu.memory_space<vmem>>) target_semaphore(%36 : memref<!tpu.dma_semaphore, #tpu.memory_space<semaphore_mem>>)
    %c3_i32_12 = arith.constant 3 : i32
    %c0_i32_13 = arith.constant 0 : i32
    %37 = tpu.memref_slice %arg4[%12, %c0_i32_13] : memref<64x4xf32, #tpu.memory_space<any>> -> memref<1x4xf32, #tpu.memory_space<any>>
    %c3_i32_14 = arith.constant 3 : i32
    %c0_i32_15 = arith.constant 0 : i32
    %38 = tpu.memref_slice %arg7[%c3_i32_14, %c0_i32_15] : memref<8x4xf32, #tpu.memory_space<vmem>> -> memref<1x4xf32, #tpu.memory_space<vmem>>
    %39 = tpu.memref_slice %arg8[%c3_i32_12] : memref<8x!tpu.dma_semaphore, #tpu.memory_space<semaphore_mem>> -> memref<1x!tpu.dma_semaphore, #tpu.memory_space<semaphore_mem>>
    %40 = tpu.memref_squeeze %39 : memref<1x!tpu.dma_semaphore, #tpu.memory_space<semaphore_mem>> -> memref<!tpu.dma_semaphore, #tpu.memory_space<semaphore_mem>>
    tpu.enqueue_dma source(%37 : memref<1x4xf32, #tpu.memory_space<any>>) target(%38 : memref<1x4xf32, #tpu.memory_space<vmem>>) target_semaphore(%40 : memref<!tpu.dma_semaphore, #tpu.memory_space<semaphore_mem>>)
    %c4_i32_16 = arith.constant 4 : i32
    %c0_i32_17 = arith.constant 0 : i32
    %41 = tpu.memref_slice %arg4[%15, %c0_i32_17] : memref<64x4xf32, #tpu.memory_space<any>> -> memref<1x4xf32, #tpu.memory_space<any>>
    %c4_i32_18 = arith.constant 4 : i32
    %c0_i32_19 = arith.constant 0 : i32
    %42 = tpu.memref_slice %arg7[%c4_i32_18, %c0_i32_19] : memref<8x4xf32, #tpu.memory_space<vmem>> -> memref<1x4xf32, #tpu.memory_space<vmem>>
    %43 = tpu.memref_slice %arg8[%c4_i32_16] : memref<8x!tpu.dma_semaphore, #tpu.memory_space<semaphore_mem>> -> memref<1x!tpu.dma_semaphore, #tpu.memory_space<semaphore_mem>>
    %44 = tpu.memref_squeeze %43 : memref<1x!tpu.dma_semaphore, #tpu.memory_space<semaphore_mem>> -> memref<!tpu.dma_semaphore, #tpu.memory_space<semaphore_mem>>
    tpu.enqueue_dma source(%41 : memref<1x4xf32, #tpu.memory_space<any>>) target(%42 : memref<1x4xf32, #tpu.memory_space<vmem>>) target_semaphore(%44 : memref<!tpu.dma_semaphore, #tpu.memory_space<semaphore_mem>>)
    %c5_i32_20 = arith.constant 5 : i32
    %c0_i32_21 = arith.constant 0 : i32
    %45 = tpu.memref_slice %arg4[%18, %c0_i32_21] : memref<64x4xf32, #tpu.memory_space<any>> -> memref<1x4xf32, #tpu.memory_space<any>>
    %c5_i32_22 = arith.constant 5 : i32
    %c0_i32_23 = arith.constant 0 : i32
    %46 = tpu.memref_slice %arg7[%c5_i32_22, %c0_i32_23] : memref<8x4xf32, #tpu.memory_space<vmem>> -> memref<1x4xf32, #tpu.memory_space<vmem>>
    %47 = tpu.memref_slice %arg8[%c5_i32_20] : memref<8x!tpu.dma_semaphore, #tpu.memory_space<semaphore_mem>> -> memref<1x!tpu.dma_semaphore, #tpu.memory_space<semaphore_mem>>
    %48 = tpu.memref_squeeze %47 : memref<1x!tpu.dma_semaphore, #tpu.memory_space<semaphore_mem>> -> memref<!tpu.dma_semaphore, #tpu.memory_space<semaphore_mem>>
    tpu.enqueue_dma source(%45 : memref<1x4xf32, #tpu.memory_space<any>>) target(%46 : memref<1x4xf32, #tpu.memory_space<vmem>>) target_semaphore(%48 : memref<!tpu.dma_semaphore, #tpu.memory_space<semaphore_mem>>)
    %c6_i32_24 = arith.constant 6 : i32
    %c0_i32_25 = arith.constant 0 : i32
    %49 = tpu.memref_slice %arg4[%21, %c0_i32_25] : memref<64x4xf32, #tpu.memory_space<any>> -> memref<1x4xf32, #tpu.memory_space<any>>
    %c6_i32_26 = arith.constant 6 : i32
    %c0_i32_27 = arith.constant 0 : i32
    %50 = tpu.memref_slice %arg7[%c6_i32_26, %c0_i32_27] : memref<8x4xf32, #tpu.memory_space<vmem>> -> memref<1x4xf32, #tpu.memory_space<vmem>>
    %51 = tpu.memref_slice %arg8[%c6_i32_24] : memref<8x!tpu.dma_semaphore, #tpu.memory_space<semaphore_mem>> -> memref<1x!tpu.dma_semaphore, #tpu.memory_space<semaphore_mem>>
    %52 = tpu.memref_squeeze %51 : memref<1x!tpu.dma_semaphore, #tpu.memory_space<semaphore_mem>> -> memref<!tpu.dma_semaphore, #tpu.memory_space<semaphore_mem>>
    tpu.enqueue_dma source(%49 : memref<1x4xf32, #tpu.memory_space<any>>) target(%50 : memref<1x4xf32, #tpu.memory_space<vmem>>) target_semaphore(%52 : memref<!tpu.dma_semaphore, #tpu.memory_space<semaphore_mem>>)
    %c7_i32_28 = arith.constant 7 : i32
    %c0_i32_29 = arith.constant 0 : i32
    %53 = tpu.memref_slice %arg4[%24, %c0_i32_29] : memref<64x4xf32, #tpu.memory_space<any>> -> memref<1x4xf32, #tpu.memory_space<any>>
    %c7_i32_30 = arith.constant 7 : i32
    %c0_i32_31 = arith.constant 0 : i32
    %54 = tpu.memref_slice %arg7[%c7_i32_30, %c0_i32_31] : memref<8x4xf32, #tpu.memory_space<vmem>> -> memref<1x4xf32, #tpu.memory_space<vmem>>
    %55 = tpu.memref_slice %arg8[%c7_i32_28] : memref<8x!tpu.dma_semaphore, #tpu.memory_space<semaphore_mem>> -> memref<1x!tpu.dma_semaphore, #tpu.memory_space<semaphore_mem>>
    %56 = tpu.memref_squeeze %55 : memref<1x!tpu.dma_semaphore, #tpu.memory_space<semaphore_mem>> -> memref<!tpu.dma_semaphore, #tpu.memory_space<semaphore_mem>>
    tpu.enqueue_dma source(%53 : memref<1x4xf32, #tpu.memory_space<any>>) target(%54 : memref<1x4xf32, #tpu.memory_space<vmem>>) target_semaphore(%56 : memref<!tpu.dma_semaphore, #tpu.memory_space<semaphore_mem>>)
    %c0_i32_32 = arith.constant 0 : i32
    %c0_i32_33 = arith.constant 0 : i32
    %57 = tpu.memref_slice %arg4[%3, %c0_i32_33] : memref<64x4xf32, #tpu.memory_space<any>> -> memref<1x4xf32, #tpu.memory_space<any>>
    %c0_i32_34 = arith.constant 0 : i32
    %c0_i32_35 = arith.constant 0 : i32
    %58 = tpu.memref_slice %arg7[%c0_i32_34, %c0_i32_35] : memref<8x4xf32, #tpu.memory_space<vmem>> -> memref<1x4xf32, #tpu.memory_space<vmem>>
    %59 = tpu.memref_slice %arg8[%c0_i32_32] : memref<8x!tpu.dma_semaphore, #tpu.memory_space<semaphore_mem>> -> memref<1x!tpu.dma_semaphore, #tpu.memory_space<semaphore_mem>>
    %60 = tpu.memref_squeeze %59 : memref<1x!tpu.dma_semaphore, #tpu.memory_space<semaphore_mem>> -> memref<!tpu.dma_semaphore, #tpu.memory_space<semaphore_mem>>
    tpu.wait_dma2 semaphore(%60 : memref<!tpu.dma_semaphore, #tpu.memory_space<semaphore_mem>>) src(%57 : memref<1x4xf32, #tpu.memory_space<any>>) dst(%58 : memref<1x4xf32, #tpu.memory_space<vmem>>)
    %c1_i32_36 = arith.constant 1 : i32
    %c0_i32_37 = arith.constant 0 : i32
    %61 = tpu.memref_slice %arg4[%6, %c0_i32_37] : memref<64x4xf32, #tpu.memory_space<any>> -> memref<1x4xf32, #tpu.memory_space<any>>
    %c1_i32_38 = arith.constant 1 : i32
    %c0_i32_39 = arith.constant 0 : i32
    %62 = tpu.memref_slice %arg7[%c1_i32_38, %c0_i32_39] : memref<8x4xf32, #tpu.memory_space<vmem>> -> memref<1x4xf32, #tpu.memory_space<vmem>>
    %63 = tpu.memref_slice %arg8[%c1_i32_36] : memref<8x!tpu.dma_semaphore, #tpu.memory_space<semaphore_mem>> -> memref<1x!tpu.dma_semaphore, #tpu.memory_space<semaphore_mem>>
    %64 = tpu.memref_squeeze %63 : memref<1x!tpu.dma_semaphore, #tpu.memory_space<semaphore_mem>> -> memref<!tpu.dma_semaphore, #tpu.memory_space<semaphore_mem>>
    tpu.wait_dma2 semaphore(%64 : memref<!tpu.dma_semaphore, #tpu.memory_space<semaphore_mem>>) src(%61 : memref<1x4xf32, #tpu.memory_space<any>>) dst(%62 : memref<1x4xf32, #tpu.memory_space<vmem>>)
    %c2_i32_40 = arith.constant 2 : i32
    %c0_i32_41 = arith.constant 0 : i32
    %65 = tpu.memref_slice %arg4[%9, %c0_i32_41] : memref<64x4xf32, #tpu.memory_space<any>> -> memref<1x4xf32, #tpu.memory_space<any>>
    %c2_i32_42 = arith.constant 2 : i32
    %c0_i32_43 = arith.constant 0 : i32
    %66 = tpu.memref_slice %arg7[%c2_i32_42, %c0_i32_43] : memref<8x4xf32, #tpu.memory_space<vmem>> -> memref<1x4xf32, #tpu.memory_space<vmem>>
    %67 = tpu.memref_slice %arg8[%c2_i32_40] : memref<8x!tpu.dma_semaphore, #tpu.memory_space<semaphore_mem>> -> memref<1x!tpu.dma_semaphore, #tpu.memory_space<semaphore_mem>>
    %68 = tpu.memref_squeeze %67 : memref<1x!tpu.dma_semaphore, #tpu.memory_space<semaphore_mem>> -> memref<!tpu.dma_semaphore, #tpu.memory_space<semaphore_mem>>
    tpu.wait_dma2 semaphore(%68 : memref<!tpu.dma_semaphore, #tpu.memory_space<semaphore_mem>>) src(%65 : memref<1x4xf32, #tpu.memory_space<any>>) dst(%66 : memref<1x4xf32, #tpu.memory_space<vmem>>)
    %c3_i32_44 = arith.constant 3 : i32
    %c0_i32_45 = arith.constant 0 : i32
    %69 = tpu.memref_slice %arg4[%12, %c0_i32_45] : memref<64x4xf32, #tpu.memory_space<any>> -> memref<1x4xf32, #tpu.memory_space<any>>
    %c3_i32_46 = arith.constant 3 : i32
    %c0_i32_47 = arith.constant 0 : i32
    %70 = tpu.memref_slice %arg7[%c3_i32_46, %c0_i32_47] : memref<8x4xf32, #tpu.memory_space<vmem>> -> memref<1x4xf32, #tpu.memory_space<vmem>>
    %71 = tpu.memref_slice %arg8[%c3_i32_44] : memref<8x!tpu.dma_semaphore, #tpu.memory_space<semaphore_mem>> -> memref<1x!tpu.dma_semaphore, #tpu.memory_space<semaphore_mem>>
    %72 = tpu.memref_squeeze %71 : memref<1x!tpu.dma_semaphore, #tpu.memory_space<semaphore_mem>> -> memref<!tpu.dma_semaphore, #tpu.memory_space<semaphore_mem>>
    tpu.wait_dma2 semaphore(%72 : memref<!tpu.dma_semaphore, #tpu.memory_space<semaphore_mem>>) src(%69 : memref<1x4xf32, #tpu.memory_space<any>>) dst(%70 : memref<1x4xf32, #tpu.memory_space<vmem>>)
    %c4_i32_48 = arith.constant 4 : i32
    %c0_i32_49 = arith.constant 0 : i32
    %73 = tpu.memref_slice %arg4[%15, %c0_i32_49] : memref<64x4xf32, #tpu.memory_space<any>> -> memref<1x4xf32, #tpu.memory_space<any>>
    %c4_i32_50 = arith.constant 4 : i32
    %c0_i32_51 = arith.constant 0 : i32
    %74 = tpu.memref_slice %arg7[%c4_i32_50, %c0_i32_51] : memref<8x4xf32, #tpu.memory_space<vmem>> -> memref<1x4xf32, #tpu.memory_space<vmem>>
    %75 = tpu.memref_slice %arg8[%c4_i32_48] : memref<8x!tpu.dma_semaphore, #tpu.memory_space<semaphore_mem>> -> memref<1x!tpu.dma_semaphore, #tpu.memory_space<semaphore_mem>>
    %76 = tpu.memref_squeeze %75 : memref<1x!tpu.dma_semaphore, #tpu.memory_space<semaphore_mem>> -> memref<!tpu.dma_semaphore, #tpu.memory_space<semaphore_mem>>
    tpu.wait_dma2 semaphore(%76 : memref<!tpu.dma_semaphore, #tpu.memory_space<semaphore_mem>>) src(%73 : memref<1x4xf32, #tpu.memory_space<any>>) dst(%74 : memref<1x4xf32, #tpu.memory_space<vmem>>)
    %c5_i32_52 = arith.constant 5 : i32
    %c0_i32_53 = arith.constant 0 : i32
    %77 = tpu.memref_slice %arg4[%18, %c0_i32_53] : memref<64x4xf32, #tpu.memory_space<any>> -> memref<1x4xf32, #tpu.memory_space<any>>
    %c5_i32_54 = arith.constant 5 : i32
    %c0_i32_55 = arith.constant 0 : i32
    %78 = tpu.memref_slice %arg7[%c5_i32_54, %c0_i32_55] : memref<8x4xf32, #tpu.memory_space<vmem>> -> memref<1x4xf32, #tpu.memory_space<vmem>>
    %79 = tpu.memref_slice %arg8[%c5_i32_52] : memref<8x!tpu.dma_semaphore, #tpu.memory_space<semaphore_mem>> -> memref<1x!tpu.dma_semaphore, #tpu.memory_space<semaphore_mem>>
    %80 = tpu.memref_squeeze %79 : memref<1x!tpu.dma_semaphore, #tpu.memory_space<semaphore_mem>> -> memref<!tpu.dma_semaphore, #tpu.memory_space<semaphore_mem>>
    tpu.wait_dma2 semaphore(%80 : memref<!tpu.dma_semaphore, #tpu.memory_space<semaphore_mem>>) src(%77 : memref<1x4xf32, #tpu.memory_space<any>>) dst(%78 : memref<1x4xf32, #tpu.memory_space<vmem>>)
    %c6_i32_56 = arith.constant 6 : i32
    %c0_i32_57 = arith.constant 0 : i32
    %81 = tpu.memref_slice %arg4[%21, %c0_i32_57] : memref<64x4xf32, #tpu.memory_space<any>> -> memref<1x4xf32, #tpu.memory_space<any>>
    %c6_i32_58 = arith.constant 6 : i32
    %c0_i32_59 = arith.constant 0 : i32
    %82 = tpu.memref_slice %arg7[%c6_i32_58, %c0_i32_59] : memref<8x4xf32, #tpu.memory_space<vmem>> -> memref<1x4xf32, #tpu.memory_space<vmem>>
    %83 = tpu.memref_slice %arg8[%c6_i32_56] : memref<8x!tpu.dma_semaphore, #tpu.memory_space<semaphore_mem>> -> memref<1x!tpu.dma_semaphore, #tpu.memory_space<semaphore_mem>>
    %84 = tpu.memref_squeeze %83 : memref<1x!tpu.dma_semaphore, #tpu.memory_space<semaphore_mem>> -> memref<!tpu.dma_semaphore, #tpu.memory_space<semaphore_mem>>
    tpu.wait_dma2 semaphore(%84 : memref<!tpu.dma_semaphore, #tpu.memory_space<semaphore_mem>>) src(%81 : memref<1x4xf32, #tpu.memory_space<any>>) dst(%82 : memref<1x4xf32, #tpu.memory_space<vmem>>)
    %c7_i32_60 = arith.constant 7 : i32
    %c0_i32_61 = arith.constant 0 : i32
    %85 = tpu.memref_slice %arg4[%24, %c0_i32_61] : memref<64x4xf32, #tpu.memory_space<any>> -> memref<1x4xf32, #tpu.memory_space<any>>
    %c7_i32_62 = arith.constant 7 : i32
    %c0_i32_63 = arith.constant 0 : i32
    %86 = tpu.memref_slice %arg7[%c7_i32_62, %c0_i32_63] : memref<8x4xf32, #tpu.memory_space<vmem>> -> memref<1x4xf32, #tpu.memory_space<vmem>>
    %87 = tpu.memref_slice %arg8[%c7_i32_60] : memref<8x!tpu.dma_semaphore, #tpu.memory_space<semaphore_mem>> -> memref<1x!tpu.dma_semaphore, #tpu.memory_space<semaphore_mem>>
    %88 = tpu.memref_squeeze %87 : memref<1x!tpu.dma_semaphore, #tpu.memory_space<semaphore_mem>> -> memref<!tpu.dma_semaphore, #tpu.memory_space<semaphore_mem>>
    tpu.wait_dma2 semaphore(%88 : memref<!tpu.dma_semaphore, #tpu.memory_space<semaphore_mem>>) src(%85 : memref<1x4xf32, #tpu.memory_space<any>>) dst(%86 : memref<1x4xf32, #tpu.memory_space<vmem>>)
    %c0 = arith.constant 0 : index
    %c0_64 = arith.constant 0 : index
    %89 = vector.load %arg2[%c0, %c0_64] : memref<8x4xf32, #tpu.memory_space<vmem>>, vector<8x4xf32>
    %cst = arith.constant dense<0xFF800000> : vector<8xf32>
    %90 = vector.multi_reduction <maximumf>, %89, %cst [1] : vector<8x4xf32> to vector<8xf32>
    %91 = vector.shape_cast %90 : vector<8xf32> to vector<8x1xf32>
    %92 = vector.broadcast %91 : vector<8x1xf32> to vector<8x4xf32>
    %93 = arith.subf %89, %92 : vector<8x4xf32>
    %94 = math.exp %93 : vector<8x4xf32>
    %cst_65 = arith.constant dense<0.000000e+00> : vector<8xf32>
    %95 = vector.multi_reduction <add>, %94, %cst_65 [1] : vector<8x4xf32> to vector<8xf32>
    %96 = vector.shape_cast %95 : vector<8xf32> to vector<8x1xf32>
    %97 = tpu.reciprocal %96 {approx = true} : vector<8x1xf32> -> vector<8x1xf32>
    %98 = vector.broadcast %97 : vector<8x1xf32> to vector<8x4xf32>
    %99 = arith.mulf %94, %98 : vector<8x4xf32>
    %cst_66 = arith.constant 9.99999974E-5 : f32
    %cst_67 = arith.constant 0.999899983 : f32
    %100 = vector.broadcast %cst_66 : f32 to vector<8x4xf32>
    %101 = arith.maximumf %100, %99 : vector<8x4xf32>
    %102 = vector.broadcast %cst_67 : f32 to vector<8x4xf32>
    %103 = arith.minimumf %102, %101 : vector<8x4xf32>
    %cst_68 = arith.constant dense<0.000000e+00> : vector<8xf32>
    %104 = vector.multi_reduction <add>, %103, %cst_68 [1] : vector<8x4xf32> to vector<8xf32>
    %105 = vector.shape_cast %104 : vector<8xf32> to vector<8x1xf32>
    %106 = tpu.reciprocal %105 {approx = true} : vector<8x1xf32> -> vector<8x1xf32>
    %107 = vector.broadcast %106 : vector<8x1xf32> to vector<8x4xf32>
    %108 = arith.mulf %103, %107 : vector<8x4xf32>
    %c0_69 = arith.constant 0 : index
    %c0_70 = arith.constant 0 : index
    %109 = vector.load %arg7[%c0_69, %c0_70] : memref<8x4xf32, #tpu.memory_space<vmem>>, vector<8x4xf32>
    %cst_71 = arith.constant 0.699999988 : f32
    %110 = vector.broadcast %cst_71 : f32 to vector<8x4xf32>
    %111 = arith.mulf %110, %109 : vector<8x4xf32>
    %cst_72 = arith.constant 3.000000e-01 : f32
    %112 = vector.broadcast %cst_72 : f32 to vector<8x4xf32>
    %113 = arith.mulf %112, %108 : vector<8x4xf32>
    %114 = arith.addf %111, %113 : vector<8x4xf32>
    %c0_73 = arith.constant 0 : index
    %c0_74 = arith.constant 0 : index
    %115 = vector.load %arg7[%c0_73, %c0_74] : memref<8x4xf32, #tpu.memory_space<vmem>>, vector<8x4xf32>
    tpu.vector_store %arg7[%c0_73, %c0_74], %114 {strides = array<i32>} : memref<8x4xf32, #tpu.memory_space<vmem>>, vector<8x4xf32>,
    %116 = tpu.iota {dimensions = array<i32: 1>} : vector<8x4xi32>
    %c0_75 = arith.constant 0 : index
    %c0_76 = arith.constant 0 : index
    %117 = vector.load %arg3[%c0_75, %c0_76] : memref<8x1xi32, #tpu.memory_space<vmem>>, vector<8x1xi32>
    %118 = vector.broadcast %117 : vector<8x1xi32> to vector<8x4xi32>
    %119 = arith.cmpi eq, %116, %118 : vector<8x4xi32>
    %cst_77 = arith.constant 0.000000e+00 : f32
    %120 = vector.broadcast %cst_77 : f32 to vector<8x4xf32>
    %121 = arith.select %119, %89, %120 : vector<8x4xi1>, vector<8x4xf32>
    %cst_78 = arith.constant dense<0.000000e+00> : vector<8xf32>
    %122 = vector.multi_reduction <add>, %121, %cst_78 [1] : vector<8x4xf32> to vector<8xf32>
    %123 = vector.shape_cast %122 : vector<8xf32> to vector<8x1xf32>
    %124 = math.log %96 : vector<8x1xf32>
    %125 = arith.addf %124, %91 : vector<8x1xf32>
    %126 = arith.subf %125, %123 : vector<8x1xf32>
    %127 = arith.mulf %114, %103 : vector<8x4xf32>
    %cst_79 = arith.constant dense<0.000000e+00> : vector<8xf32>
    %128 = vector.multi_reduction <add>, %127, %cst_79 [1] : vector<8x4xf32> to vector<8xf32>
    %129 = vector.shape_cast %128 : vector<8xf32> to vector<8x1xf32>
    %cst_80 = arith.constant 1.000000e+00 : f32
    %130 = vector.broadcast %cst_80 : f32 to vector<8x1xf32>
    %131 = arith.subf %130, %129 : vector<8x1xf32>
    %132 = math.log %131 : vector<8x1xf32>
    %cst_81 = arith.constant 5.000000e-01 : f32
    %133 = vector.broadcast %cst_81 : f32 to vector<8x1xf32>
    %134 = arith.mulf %133, %132 : vector<8x1xf32>
    %135 = arith.addf %126, %134 : vector<8x1xf32>
    %c0_82 = arith.constant 0 : index
    %c0_83 = arith.constant 0 : index
    %136 = vector.load %arg5[%c0_82, %c0_83] : memref<8x1xf32, #tpu.memory_space<vmem>>, vector<8x1xf32>
    tpu.vector_store %arg5[%c0_82, %c0_83], %135 {strides = array<i32>} : memref<8x1xf32, #tpu.memory_space<vmem>>, vector<8x1xf32>,
    %c0_i32_84 = arith.constant 0 : i32
    %c0_i32_85 = arith.constant 0 : i32
    %c0_i32_86 = arith.constant 0 : i32
    %137 = tpu.memref_slice %arg7[%c0_i32_85, %c0_i32_86] : memref<8x4xf32, #tpu.memory_space<vmem>> -> memref<1x4xf32, #tpu.memory_space<vmem>>
    %c0_i32_87 = arith.constant 0 : i32
    %138 = tpu.memref_slice %arg6[%3, %c0_i32_87] : memref<64x4xf32, #tpu.memory_space<any>> -> memref<1x4xf32, #tpu.memory_space<any>>
    %139 = tpu.memref_slice %arg9[%c0_i32_84] : memref<8x!tpu.dma_semaphore, #tpu.memory_space<semaphore_mem>> -> memref<1x!tpu.dma_semaphore, #tpu.memory_space<semaphore_mem>>
    %140 = tpu.memref_squeeze %139 : memref<1x!tpu.dma_semaphore, #tpu.memory_space<semaphore_mem>> -> memref<!tpu.dma_semaphore, #tpu.memory_space<semaphore_mem>>
    tpu.enqueue_dma source(%137 : memref<1x4xf32, #tpu.memory_space<vmem>>) target(%138 : memref<1x4xf32, #tpu.memory_space<any>>) target_semaphore(%140 : memref<!tpu.dma_semaphore, #tpu.memory_space<semaphore_mem>>)
    %c1_i32_88 = arith.constant 1 : i32
    %c1_i32_89 = arith.constant 1 : i32
    %c0_i32_90 = arith.constant 0 : i32
    %141 = tpu.memref_slice %arg7[%c1_i32_89, %c0_i32_90] : memref<8x4xf32, #tpu.memory_space<vmem>> -> memref<1x4xf32, #tpu.memory_space<vmem>>
    %c0_i32_91 = arith.constant 0 : i32
    %142 = tpu.memref_slice %arg6[%6, %c0_i32_91] : memref<64x4xf32, #tpu.memory_space<any>> -> memref<1x4xf32, #tpu.memory_space<any>>
    %143 = tpu.memref_slice %arg9[%c1_i32_88] : memref<8x!tpu.dma_semaphore, #tpu.memory_space<semaphore_mem>> -> memref<1x!tpu.dma_semaphore, #tpu.memory_space<semaphore_mem>>
    %144 = tpu.memref_squeeze %143 : memref<1x!tpu.dma_semaphore, #tpu.memory_space<semaphore_mem>> -> memref<!tpu.dma_semaphore, #tpu.memory_space<semaphore_mem>>
    tpu.enqueue_dma source(%141 : memref<1x4xf32, #tpu.memory_space<vmem>>) target(%142 : memref<1x4xf32, #tpu.memory_space<any>>) target_semaphore(%144 : memref<!tpu.dma_semaphore, #tpu.memory_space<semaphore_mem>>)
    %c2_i32_92 = arith.constant 2 : i32
    %c2_i32_93 = arith.constant 2 : i32
    %c0_i32_94 = arith.constant 0 : i32
    %145 = tpu.memref_slice %arg7[%c2_i32_93, %c0_i32_94] : memref<8x4xf32, #tpu.memory_space<vmem>> -> memref<1x4xf32, #tpu.memory_space<vmem>>
    %c0_i32_95 = arith.constant 0 : i32
    %146 = tpu.memref_slice %arg6[%9, %c0_i32_95] : memref<64x4xf32, #tpu.memory_space<any>> -> memref<1x4xf32, #tpu.memory_space<any>>
    %147 = tpu.memref_slice %arg9[%c2_i32_92] : memref<8x!tpu.dma_semaphore, #tpu.memory_space<semaphore_mem>> -> memref<1x!tpu.dma_semaphore, #tpu.memory_space<semaphore_mem>>
    %148 = tpu.memref_squeeze %147 : memref<1x!tpu.dma_semaphore, #tpu.memory_space<semaphore_mem>> -> memref<!tpu.dma_semaphore, #tpu.memory_space<semaphore_mem>>
    tpu.enqueue_dma source(%145 : memref<1x4xf32, #tpu.memory_space<vmem>>) target(%146 : memref<1x4xf32, #tpu.memory_space<any>>) target_semaphore(%148 : memref<!tpu.dma_semaphore, #tpu.memory_space<semaphore_mem>>)
    %c3_i32_96 = arith.constant 3 : i32
    %c3_i32_97 = arith.constant 3 : i32
    %c0_i32_98 = arith.constant 0 : i32
    %149 = tpu.memref_slice %arg7[%c3_i32_97, %c0_i32_98] : memref<8x4xf32, #tpu.memory_space<vmem>> -> memref<1x4xf32, #tpu.memory_space<vmem>>
    %c0_i32_99 = arith.constant 0 : i32
    %150 = tpu.memref_slice %arg6[%12, %c0_i32_99] : memref<64x4xf32, #tpu.memory_space<any>> -> memref<1x4xf32, #tpu.memory_space<any>>
    %151 = tpu.memref_slice %arg9[%c3_i32_96] : memref<8x!tpu.dma_semaphore, #tpu.memory_space<semaphore_mem>> -> memref<1x!tpu.dma_semaphore, #tpu.memory_space<semaphore_mem>>
    %152 = tpu.memref_squeeze %151 : memref<1x!tpu.dma_semaphore, #tpu.memory_space<semaphore_mem>> -> memref<!tpu.dma_semaphore, #tpu.memory_space<semaphore_mem>>
    tpu.enqueue_dma source(%149 : memref<1x4xf32, #tpu.memory_space<vmem>>) target(%150 : memref<1x4xf32, #tpu.memory_space<any>>) target_semaphore(%152 : memref<!tpu.dma_semaphore, #tpu.memory_space<semaphore_mem>>)
    %c4_i32_100 = arith.constant 4 : i32
    %c4_i32_101 = arith.constant 4 : i32
    %c0_i32_102 = arith.constant 0 : i32
    %153 = tpu.memref_slice %arg7[%c4_i32_101, %c0_i32_102] : memref<8x4xf32, #tpu.memory_space<vmem>> -> memref<1x4xf32, #tpu.memory_space<vmem>>
    %c0_i32_103 = arith.constant 0 : i32
    %154 = tpu.memref_slice %arg6[%15, %c0_i32_103] : memref<64x4xf32, #tpu.memory_space<any>> -> memref<1x4xf32, #tpu.memory_space<any>>
    %155 = tpu.memref_slice %arg9[%c4_i32_100] : memref<8x!tpu.dma_semaphore, #tpu.memory_space<semaphore_mem>> -> memref<1x!tpu.dma_semaphore, #tpu.memory_space<semaphore_mem>>
    %156 = tpu.memref_squeeze %155 : memref<1x!tpu.dma_semaphore, #tpu.memory_space<semaphore_mem>> -> memref<!tpu.dma_semaphore, #tpu.memory_space<semaphore_mem>>
    tpu.enqueue_dma source(%153 : memref<1x4xf32, #tpu.memory_space<vmem>>) target(%154 : memref<1x4xf32, #tpu.memory_space<any>>) target_semaphore(%156 : memref<!tpu.dma_semaphore, #tpu.memory_space<semaphore_mem>>)
    %c5_i32_104 = arith.constant 5 : i32
    %c5_i32_105 = arith.constant 5 : i32
    %c0_i32_106 = arith.constant 0 : i32
    %157 = tpu.memref_slice %arg7[%c5_i32_105, %c0_i32_106] : memref<8x4xf32, #tpu.memory_space<vmem>> -> memref<1x4xf32, #tpu.memory_space<vmem>>
    %c0_i32_107 = arith.constant 0 : i32
    %158 = tpu.memref_slice %arg6[%18, %c0_i32_107] : memref<64x4xf32, #tpu.memory_space<any>> -> memref<1x4xf32, #tpu.memory_space<any>>
    %159 = tpu.memref_slice %arg9[%c5_i32_104] : memref<8x!tpu.dma_semaphore, #tpu.memory_space<semaphore_mem>> -> memref<1x!tpu.dma_semaphore, #tpu.memory_space<semaphore_mem>>
    %160 = tpu.memref_squeeze %159 : memref<1x!tpu.dma_semaphore, #tpu.memory_space<semaphore_mem>> -> memref<!tpu.dma_semaphore, #tpu.memory_space<semaphore_mem>>
    tpu.enqueue_dma source(%157 : memref<1x4xf32, #tpu.memory_space<vmem>>) target(%158 : memref<1x4xf32, #tpu.memory_space<any>>) target_semaphore(%160 : memref<!tpu.dma_semaphore, #tpu.memory_space<semaphore_mem>>)
    %c6_i32_108 = arith.constant 6 : i32
    %c6_i32_109 = arith.constant 6 : i32
    %c0_i32_110 = arith.constant 0 : i32
    %161 = tpu.memref_slice %arg7[%c6_i32_109, %c0_i32_110] : memref<8x4xf32, #tpu.memory_space<vmem>> -> memref<1x4xf32, #tpu.memory_space<vmem>>
    %c0_i32_111 = arith.constant 0 : i32
    %162 = tpu.memref_slice %arg6[%21, %c0_i32_111] : memref<64x4xf32, #tpu.memory_space<any>> -> memref<1x4xf32, #tpu.memory_space<any>>
    %163 = tpu.memref_slice %arg9[%c6_i32_108] : memref<8x!tpu.dma_semaphore, #tpu.memory_space<semaphore_mem>> -> memref<1x!tpu.dma_semaphore, #tpu.memory_space<semaphore_mem>>
    %164 = tpu.memref_squeeze %163 : memref<1x!tpu.dma_semaphore, #tpu.memory_space<semaphore_mem>> -> memref<!tpu.dma_semaphore, #tpu.memory_space<semaphore_mem>>
    tpu.enqueue_dma source(%161 : memref<1x4xf32, #tpu.memory_space<vmem>>) target(%162 : memref<1x4xf32, #tpu.memory_space<any>>) target_semaphore(%164 : memref<!tpu.dma_semaphore, #tpu.memory_space<semaphore_mem>>)
    %c7_i32_112 = arith.constant 7 : i32
    %c7_i32_113 = arith.constant 7 : i32
    %c0_i32_114 = arith.constant 0 : i32
    %165 = tpu.memref_slice %arg7[%c7_i32_113, %c0_i32_114] : memref<8x4xf32, #tpu.memory_space<vmem>> -> memref<1x4xf32, #tpu.memory_space<vmem>>
    %c0_i32_115 = arith.constant 0 : i32
    %166 = tpu.memref_slice %arg6[%24, %c0_i32_115] : memref<64x4xf32, #tpu.memory_space<any>> -> memref<1x4xf32, #tpu.memory_space<any>>
    %167 = tpu.memref_slice %arg9[%c7_i32_112] : memref<8x!tpu.dma_semaphore, #tpu.memory_space<semaphore_mem>> -> memref<1x!tpu.dma_semaphore, #tpu.memory_space<semaphore_mem>>
    %168 = tpu.memref_squeeze %167 : memref<1x!tpu.dma_semaphore, #tpu.memory_space<semaphore_mem>> -> memref<!tpu.dma_semaphore, #tpu.memory_space<semaphore_mem>>
    tpu.enqueue_dma source(%165 : memref<1x4xf32, #tpu.memory_space<vmem>>) target(%166 : memref<1x4xf32, #tpu.memory_space<any>>) target_semaphore(%168 : memref<!tpu.dma_semaphore, #tpu.memory_space<semaphore_mem>>)
    %c0_i32_116 = arith.constant 0 : i32
    %c0_i32_117 = arith.constant 0 : i32
    %c0_i32_118 = arith.constant 0 : i32
    %169 = tpu.memref_slice %arg7[%c0_i32_117, %c0_i32_118] : memref<8x4xf32, #tpu.memory_space<vmem>> -> memref<1x4xf32, #tpu.memory_space<vmem>>
    %c0_i32_119 = arith.constant 0 : i32
    %170 = tpu.memref_slice %arg6[%3, %c0_i32_119] : memref<64x4xf32, #tpu.memory_space<any>> -> memref<1x4xf32, #tpu.memory_space<any>>
    %171 = tpu.memref_slice %arg9[%c0_i32_116] : memref<8x!tpu.dma_semaphore, #tpu.memory_space<semaphore_mem>> -> memref<1x!tpu.dma_semaphore, #tpu.memory_space<semaphore_mem>>
    %172 = tpu.memref_squeeze %171 : memref<1x!tpu.dma_semaphore, #tpu.memory_space<semaphore_mem>> -> memref<!tpu.dma_semaphore, #tpu.memory_space<semaphore_mem>>
    tpu.wait_dma2 semaphore(%172 : memref<!tpu.dma_semaphore, #tpu.memory_space<semaphore_mem>>) src(%169 : memref<1x4xf32, #tpu.memory_space<vmem>>) dst(%170 : memref<1x4xf32, #tpu.memory_space<any>>)
    %c1_i32_120 = arith.constant 1 : i32
    %c1_i32_121 = arith.constant 1 : i32
    %c0_i32_122 = arith.constant 0 : i32
    %173 = tpu.memref_slice %arg7[%c1_i32_121, %c0_i32_122] : memref<8x4xf32, #tpu.memory_space<vmem>> -> memref<1x4xf32, #tpu.memory_space<vmem>>
    %c0_i32_123 = arith.constant 0 : i32
    %174 = tpu.memref_slice %arg6[%6, %c0_i32_123] : memref<64x4xf32, #tpu.memory_space<any>> -> memref<1x4xf32, #tpu.memory_space<any>>
    %175 = tpu.memref_slice %arg9[%c1_i32_120] : memref<8x!tpu.dma_semaphore, #tpu.memory_space<semaphore_mem>> -> memref<1x!tpu.dma_semaphore, #tpu.memory_space<semaphore_mem>>
    %176 = tpu.memref_squeeze %175 : memref<1x!tpu.dma_semaphore, #tpu.memory_space<semaphore_mem>> -> memref<!tpu.dma_semaphore, #tpu.memory_space<semaphore_mem>>
    tpu.wait_dma2 semaphore(%176 : memref<!tpu.dma_semaphore, #tpu.memory_space<semaphore_mem>>) src(%173 : memref<1x4xf32, #tpu.memory_space<vmem>>) dst(%174 : memref<1x4xf32, #tpu.memory_space<any>>)
    %c2_i32_124 = arith.constant 2 : i32
    %c2_i32_125 = arith.constant 2 : i32
    %c0_i32_126 = arith.constant 0 : i32
    %177 = tpu.memref_slice %arg7[%c2_i32_125, %c0_i32_126] : memref<8x4xf32, #tpu.memory_space<vmem>> -> memref<1x4xf32, #tpu.memory_space<vmem>>
    %c0_i32_127 = arith.constant 0 : i32
    %178 = tpu.memref_slice %arg6[%9, %c0_i32_127] : memref<64x4xf32, #tpu.memory_space<any>> -> memref<1x4xf32, #tpu.memory_space<any>>
    %179 = tpu.memref_slice %arg9[%c2_i32_124] : memref<8x!tpu.dma_semaphore, #tpu.memory_space<semaphore_mem>> -> memref<1x!tpu.dma_semaphore, #tpu.memory_space<semaphore_mem>>
    %180 = tpu.memref_squeeze %179 : memref<1x!tpu.dma_semaphore, #tpu.memory_space<semaphore_mem>> -> memref<!tpu.dma_semaphore, #tpu.memory_space<semaphore_mem>>
    tpu.wait_dma2 semaphore(%180 : memref<!tpu.dma_semaphore, #tpu.memory_space<semaphore_mem>>) src(%177 : memref<1x4xf32, #tpu.memory_space<vmem>>) dst(%178 : memref<1x4xf32, #tpu.memory_space<any>>)
    %c3_i32_128 = arith.constant 3 : i32
    %c3_i32_129 = arith.constant 3 : i32
    %c0_i32_130 = arith.constant 0 : i32
    %181 = tpu.memref_slice %arg7[%c3_i32_129, %c0_i32_130] : memref<8x4xf32, #tpu.memory_space<vmem>> -> memref<1x4xf32, #tpu.memory_space<vmem>>
    %c0_i32_131 = arith.constant 0 : i32
    %182 = tpu.memref_slice %arg6[%12, %c0_i32_131] : memref<64x4xf32, #tpu.memory_space<any>> -> memref<1x4xf32, #tpu.memory_space<any>>
    %183 = tpu.memref_slice %arg9[%c3_i32_128] : memref<8x!tpu.dma_semaphore, #tpu.memory_space<semaphore_mem>> -> memref<1x!tpu.dma_semaphore, #tpu.memory_space<semaphore_mem>>
    %184 = tpu.memref_squeeze %183 : memref<1x!tpu.dma_semaphore, #tpu.memory_space<semaphore_mem>> -> memref<!tpu.dma_semaphore, #tpu.memory_space<semaphore_mem>>
    tpu.wait_dma2 semaphore(%184 : memref<!tpu.dma_semaphore, #tpu.memory_space<semaphore_mem>>) src(%181 : memref<1x4xf32, #tpu.memory_space<vmem>>) dst(%182 : memref<1x4xf32, #tpu.memory_space<any>>)
    %c4_i32_132 = arith.constant 4 : i32
    %c4_i32_133 = arith.constant 4 : i32
    %c0_i32_134 = arith.constant 0 : i32
    %185 = tpu.memref_slice %arg7[%c4_i32_133, %c0_i32_134] : memref<8x4xf32, #tpu.memory_space<vmem>> -> memref<1x4xf32, #tpu.memory_space<vmem>>
    %c0_i32_135 = arith.constant 0 : i32
    %186 = tpu.memref_slice %arg6[%15, %c0_i32_135] : memref<64x4xf32, #tpu.memory_space<any>> -> memref<1x4xf32, #tpu.memory_space<any>>
    %187 = tpu.memref_slice %arg9[%c4_i32_132] : memref<8x!tpu.dma_semaphore, #tpu.memory_space<semaphore_mem>> -> memref<1x!tpu.dma_semaphore, #tpu.memory_space<semaphore_mem>>
    %188 = tpu.memref_squeeze %187 : memref<1x!tpu.dma_semaphore, #tpu.memory_space<semaphore_mem>> -> memref<!tpu.dma_semaphore, #tpu.memory_space<semaphore_mem>>
    tpu.wait_dma2 semaphore(%188 : memref<!tpu.dma_semaphore, #tpu.memory_space<semaphore_mem>>) src(%185 : memref<1x4xf32, #tpu.memory_space<vmem>>) dst(%186 : memref<1x4xf32, #tpu.memory_space<any>>)
    %c5_i32_136 = arith.constant 5 : i32
    %c5_i32_137 = arith.constant 5 : i32
    %c0_i32_138 = arith.constant 0 : i32
    %189 = tpu.memref_slice %arg7[%c5_i32_137, %c0_i32_138] : memref<8x4xf32, #tpu.memory_space<vmem>> -> memref<1x4xf32, #tpu.memory_space<vmem>>
    %c0_i32_139 = arith.constant 0 : i32
    %190 = tpu.memref_slice %arg6[%18, %c0_i32_139] : memref<64x4xf32, #tpu.memory_space<any>> -> memref<1x4xf32, #tpu.memory_space<any>>
    %191 = tpu.memref_slice %arg9[%c5_i32_136] : memref<8x!tpu.dma_semaphore, #tpu.memory_space<semaphore_mem>> -> memref<1x!tpu.dma_semaphore, #tpu.memory_space<semaphore_mem>>
    %192 = tpu.memref_squeeze %191 : memref<1x!tpu.dma_semaphore, #tpu.memory_space<semaphore_mem>> -> memref<!tpu.dma_semaphore, #tpu.memory_space<semaphore_mem>>
    tpu.wait_dma2 semaphore(%192 : memref<!tpu.dma_semaphore, #tpu.memory_space<semaphore_mem>>) src(%189 : memref<1x4xf32, #tpu.memory_space<vmem>>) dst(%190 : memref<1x4xf32, #tpu.memory_space<any>>)
    %c6_i32_140 = arith.constant 6 : i32
    %c6_i32_141 = arith.constant 6 : i32
    %c0_i32_142 = arith.constant 0 : i32
    %193 = tpu.memref_slice %arg7[%c6_i32_141, %c0_i32_142] : memref<8x4xf32, #tpu.memory_space<vmem>> -> memref<1x4xf32, #tpu.memory_space<vmem>>
    %c0_i32_143 = arith.constant 0 : i32
    %194 = tpu.memref_slice %arg6[%21, %c0_i32_143] : memref<64x4xf32, #tpu.memory_space<any>> -> memref<1x4xf32, #tpu.memory_space<any>>
    %195 = tpu.memref_slice %arg9[%c6_i32_140] : memref<8x!tpu.dma_semaphore, #tpu.memory_space<semaphore_mem>> -> memref<1x!tpu.dma_semaphore, #tpu.memory_space<semaphore_mem>>
    %196 = tpu.memref_squeeze %195 : memref<1x!tpu.dma_semaphore, #tpu.memory_space<semaphore_mem>> -> memref<!tpu.dma_semaphore, #tpu.memory_space<semaphore_mem>>
    tpu.wait_dma2 semaphore(%196 : memref<!tpu.dma_semaphore, #tpu.memory_space<semaphore_mem>>) src(%193 : memref<1x4xf32, #tpu.memory_space<vmem>>) dst(%194 : memref<1x4xf32, #tpu.memory_space<any>>)
    %c7_i32_144 = arith.constant 7 : i32
    %c7_i32_145 = arith.constant 7 : i32
    %c0_i32_146 = arith.constant 0 : i32
    %197 = tpu.memref_slice %arg7[%c7_i32_145, %c0_i32_146] : memref<8x4xf32, #tpu.memory_space<vmem>> -> memref<1x4xf32, #tpu.memory_space<vmem>>
    %c0_i32_147 = arith.constant 0 : i32
    %198 = tpu.memref_slice %arg6[%24, %c0_i32_147] : memref<64x4xf32, #tpu.memory_space<any>> -> memref<1x4xf32, #tpu.memory_space<any>>
    %199 = tpu.memref_slice %arg9[%c7_i32_144] : memref<8x!tpu.dma_semaphore, #tpu.memory_space<semaphore_mem>> -> memref<1x!tpu.dma_semaphore, #tpu.memory_space<semaphore_mem>>
    %200 = tpu.memref_squeeze %199 : memref<1x!tpu.dma_semaphore, #tpu.memory_space<semaphore_mem>> -> memref<!tpu.dma_semaphore, #tpu.memory_space<semaphore_mem>>
    tpu.wait_dma2 semaphore(%200 : memref<!tpu.dma_semaphore, #tpu.memory_space<semaphore_mem>>) src(%197 : memref<1x4xf32, #tpu.memory_space<vmem>>) dst(%198 : memref<1x4xf32, #tpu.memory_space<any>>)
    return
  }
  func.func @transform_0(%arg0: i32, %arg1: memref<16xi32, #tpu.memory_space<smem>>) -> (i32, i32) {
    %c0_i32 = arith.constant 0 : i32
    %c0_i32_0 = arith.constant 0 : i32
    return %arg0, %c0_i32 : i32, i32
  }
  func.func @transform_1(%arg0: i32, %arg1: memref<16xi32, #tpu.memory_space<smem>>) -> (i32, i32) {
    %c0_i32 = arith.constant 0 : i32
    %c0_i32_0 = arith.constant 0 : i32
    return %arg0, %c0_i32 : i32, i32
  }
  func.func @transform_3(%arg0: i32, %arg1: memref<16xi32, #tpu.memory_space<smem>>) -> (i32, i32) {
    %c0_i32 = arith.constant 0 : i32
    %c0_i32_0 = arith.constant 0 : i32
    return %arg0, %c0_i32 : i32, i32
  }
}

</mosaic_0001>

<llo_original>
// kernel: tpu_custom_call.1
$region0: #{tpu_custom_call.1}
  #allocation0 [shape = 'u32[]', space=smem, size = 0x4, offset = 0x4, fixed_abs, tag = 'smem constant byte address 0x4 - core index']
  #allocation1 [shape = 'u32[144,128]{1,0:T(1,128)}', space=vmem, size = 0x12000, scoped, tag = 'internal scratch']
  #allocation2 [shape = 'f32[8,4]{1,0:T(8,128)}', space=vmem, size = 0x1000, scoped, tag = 'scratch operand']
  #allocation3 [shape = 's32[8]{0}', space=sflag, size = 0x20, scoped, tag = 'scratch operand']
  #allocation4 [shape = 's32[8]{0}', space=sflag, size = 0x20, scoped, tag = 'scratch operand']
  #allocation5 [shape = 's32[1]{0}', space=sflag, size = 0x4, scoped, tag = 'scoped memory for tpu_custom_call.1']
  #allocation6 [shape = 'u8[512]{0}', space=smem, size = 0x200, scoped, tag = 'prefetched SMEM operand 0']
  #allocation7 [shape = 's32[]', space=sflag, size = 0x4, offset = 0, fixed_abs, tag = 'sflag constant byte address 0x0 - dummy sync flag']
  #allocation8 [shape = 's32[]', space=sflag, size = 0x4, offset = 0, fixed_abs, tag = 'sflag constant byte address 0x0 - dummy sync flag']
  #allocation9 [shape = 's32[]', space=sflag, size = 0x4, offset = 0, fixed_abs, tag = 'sflag constant byte address 0x0 - dummy sync flag']
  #allocation10 [shape = 's32[]', space=sflag, size = 0x4, offset = 0, fixed_abs, tag = 'sflag constant byte address 0x0 - dummy sync flag']
  #allocation11 [shape = 's32[]', space=sflag, size = 0x4, offset = 0, fixed_abs, tag = 'sflag constant byte address 0x0 - dummy sync flag']
  #allocation12 [shape = 's32[]', space=sflag, size = 0x4, offset = 0, fixed_abs, tag = 'sflag constant byte address 0x0 - dummy sync flag']
  #allocation13 [shape = 's32[]', space=sflag, size = 0x4, offset = 0, fixed_abs, tag = 'sflag constant byte address 0x0 - dummy sync flag']
  #allocation14 [shape = 's32[]', space=sflag, size = 0x4, offset = 0, fixed_abs, tag = 'sflag constant byte address 0x0 - dummy sync flag']
  #allocation15 [shape = 's32[]', space=sflag, size = 0x4, offset = 0, fixed_abs, tag = 'sflag constant byte address 0x0 - dummy sync flag']
  #allocation16 [shape = 's32[]', space=sflag, size = 0x4, offset = 0, fixed_abs, tag = 'sflag constant byte address 0x0 - dummy sync flag']
  #allocation17 [shape = 's32[]', space=sflag, size = 0x4, offset = 0, fixed_abs, tag = 'sflag constant byte address 0x0 - dummy sync flag']
  #allocation18 [shape = 's32[]', space=sflag, size = 0x4, offset = 0, fixed_abs, tag = 'sflag constant byte address 0x0 - dummy sync flag']
  #allocation19 [shape = 's32[]', space=sflag, size = 0x4, offset = 0, fixed_abs, tag = 'sflag constant byte address 0x0 - dummy sync flag']
  #allocation20 [shape = 's32[]', space=sflag, size = 0x4, offset = 0, fixed_abs, tag = 'sflag constant byte address 0x0 - dummy sync flag']
  #allocation21 [shape = 's32[]', space=sflag, size = 0x4, offset = 0, fixed_abs, tag = 'sflag constant byte address 0x0 - dummy sync flag']
  #allocation22 [shape = 's32[]', space=sflag, size = 0x4, offset = 0, fixed_abs, tag = 'sflag constant byte address 0x0 - dummy sync flag']
  %s0 = inlined_call_operand.vmem [shape: s32[16], index: 0, kind: input, shape index: {}]
  %s1 = inlined_call_operand.vmem [shape: f32[16,4], index: 1, kind: input, shape index: {}]
  %s2 = inlined_call_operand.vmem [shape: s32[16,1], index: 2, kind: input, shape index: {}]
  %s3 = inlined_call_operand.vmem [shape: f32[64,4], index: 3, kind: input, shape index: {}, may-alias: {3,5}]
  %s4 = inlined_call_operand.vmem [shape: f32[16,1], index: 4, kind: output, shape index: {0}]
  %s5 = inlined_call_operand.vmem [shape: f32[64,4], index: 5, kind: output, shape index: {1}, may-alias: {3,5}]
  %6 = xla_tuple %s4, %s5
  %s7 = sld [smem:[#allocation0]]
  $region521: #{tpu_custom_call.1} parent=0
    _
  %s9 = ssub.s32 1, %s7
  %s10 = scalar_select 0, %s9, %s7
  %s11 = sshll.u32 %s0, 4
  %s12 = int_to_ptr.vmem [resolvable:$true] %s11
  %14 = dma.vmem_to_smem %s12, 16, [#allocation6], [#allocation5]
  %15 = dma.done [#allocation5], 16
  %16 = sfence
  loop: start=0, step=1, limit=4
  $region2: #{tpu_custom_call.1} parent=0 // loop_pre_header
    _
  $region3: #{tpu_custom_call.1} parent=0 // loop_header
    %s18 = sphi 0, %s22
    %p19 = scmp.ge.s32.totalorder %s18, 4
    %s28 = sphi 0, %s30
    %s31 = sphi 0, %s28
    %s32 = sphi 0, %s31
    %s48 = sphi 0, %s32
    %s54 = sphi 0, %s56
    %s57 = sphi 0, %s54
    %s58 = sphi 0, %s57
    %s74 = sphi 0, %s58
    %s80 = sphi 0, %s82
    %s83 = sphi 0, %s80
    %s84 = sphi 0, %s83
    %s100 = sphi 0, %s84
  $region4: #{tpu_custom_call.1} parent=0 // loop_header_branch
    %21 = sbr.rel (%p19) target = $region8
  $region5: #{tpu_custom_call.1} parent=0 // loop_body
    %s23 = ssub.s32 %s18, 1
    %s24 = ssub.s32 %s18, 2
    %s25 = sadd.s32 %s18, 1
    %s26 = ssub.s32 %s18, %s25
    %p27 = scmp.eq.s32.totalorder %s26, 0
    %s29 = sadd.s32 %s28, 1
    %s30 = scalar_select %p27, %s28, %s29
    %p33 = pneg %p27
    %p34 = scmp.eq.s32.totalorder %s18, 1
    %p35 = por %p33, %p34
    %p36 = scmp.ne.s32.totalorder %s28, %s31
    %p37 = scmp.eq.s32.totalorder %s18, 0
    %p38 = por %p36, %p37
    %p39 = scmp.ne.s32.totalorder %s28, %s31
    %p40 = scmp.eq.s32.totalorder %s23, 1
    %p41 = por %p39, %p40
    %p42 = scmp.ne.s32.totalorder %s31, %s32
    %p43 = scmp.eq.s32.totalorder %s23, 0
    %p44 = por %p42, %p43
    %p45 = scmp.ne.s32.totalorder %s31, %s32
    %p46 = scmp.eq.s32.totalorder %s24, 1
    %p47 = por %p45, %p46
    %p49 = scmp.ne.s32.totalorder %s32, %s48
    %p50 = scmp.eq.s32.totalorder %s24, 0
    %p51 = por %p49, %p50
    %s52 = ssub.s32 %s18, %s25
    %p53 = scmp.eq.s32.totalorder %s52, 0
    %s55 = sadd.s32 %s54, 1
    %s56 = scalar_select %p53, %s54, %s55
    %p59 = pneg %p53
    %p60 = scmp.eq.s32.totalorder %s18, 1
    %p61 = por %p59, %p60
    %p62 = scmp.ne.s32.totalorder %s54, %s57
    %p63 = scmp.eq.s32.totalorder %s18, 0
    %p64 = por %p62, %p63
    %p65 = scmp.ne.s32.totalorder %s54, %s57
    %p66 = scmp.eq.s32.totalorder %s23, 1
    %p67 = por %p65, %p66
    %p68 = scmp.ne.s32.totalorder %s57, %s58
    %p69 = scmp.eq.s32.totalorder %s23, 0
    %p70 = por %p68, %p69
    %p71 = scmp.ne.s32.totalorder %s57, %s58
    %p72 = scmp.eq.s32.totalorder %s24, 1
    %p73 = por %p71, %p72
    %p75 = scmp.ne.s32.totalorder %s58, %s74
    %p76 = scmp.eq.s32.totalorder %s24, 0
    %p77 = por %p75, %p76
    %s78 = ssub.s32 %s18, %s25
    %p79 = scmp.eq.s32.totalorder %s78, 0
    %s81 = sadd.s32 %s80, 1
    %s82 = scalar_select %p79, %s80, %s81
    %p85 = pneg %p79
    %p86 = scmp.eq.s32.totalorder %s18, 1
    %p87 = por %p85, %p86
    %p88 = scmp.ne.s32.totalorder %s80, %s83
    %p89 = scmp.eq.s32.totalorder %s18, 0
    %p90 = por %p88, %p89
    %p91 = scmp.ne.s32.totalorder %s80, %s83
    %p92 = scmp.eq.s32.totalorder %s23, 1
    %p93 = por %p91, %p92
    %p94 = scmp.ne.s32.totalorder %s83, %s84
    %p95 = scmp.eq.s32.totalorder %s23, 0
    %p96 = por %p94, %p95
    %p97 = scmp.ne.s32.totalorder %s83, %s84
    %p98 = scmp.eq.s32.totalorder %s24, 1
    %p99 = por %p97, %p98
    %p101 = scmp.ne.s32.totalorder %s84, %s100
    %p102 = scmp.eq.s32.totalorder %s24, 0
    %p103 = por %p101, %p102
    %p104 = scmp.le.s32.totalorder 1, %s18
    %p105 = scmp.lt.s32.totalorder %s18, 3
    %p106 = pnand %p104, %p105
    %p107 = pneg %p106
    // Predicated region
    $region9: #{tpu_custom_call.1} parent=5 // pred_check
      _
    $region10: #{tpu_custom_call.1} parent=5 // pred_check_branch
      %109 = sbr.rel (%p106) target = $region12
    $region11: #{tpu_custom_call.1} parent=5 // pred_region
      %s110 = ssub.s32 %s18, 1
    $region12: #{tpu_custom_call.1} parent=5 // pred_fallthru
      _
    %p111 = scmp.lt.s32.totalorder %s18, 2
    // Predicated region
    $region13: #{tpu_custom_call.1} parent=5 // pred_check
      %p112 = pneg %p111
    $region14: #{tpu_custom_call.1} parent=5 // pred_check_branch
      %114 = sbr.rel (%p112) target = $region16
    $region15: #{tpu_custom_call.1} parent=5 // pred_region
      // Predicated region
      $region17: #{tpu_custom_call.1} parent=15 // pred_check
        %p115 = pneg %p38
      $region18: #{tpu_custom_call.1} parent=15 // pred_check_branch
        %117 = sbr.rel (%p115) target = $region20
      $region19: #{tpu_custom_call.1} parent=15 // pred_region
        %p118 = scmp.lt.s32.totalorder %s18, 1
        %s119 = scalar_select %p118, %s18, 1
        %s120 = smul.addr %s119, 8
        %s121 = scalar_lea.vmem %s1, %s120
      $region20: #{tpu_custom_call.1} parent=15 // pred_fallthru
        _
      // Predicated region
      $region21: #{tpu_custom_call.1} parent=15 // pred_check
        %p122 = pneg %p64
      $region22: #{tpu_custom_call.1} parent=15 // pred_check_branch
        %124 = sbr.rel (%p122) target = $region24
      $region23: #{tpu_custom_call.1} parent=15 // pred_region
        %p125 = scmp.lt.s32.totalorder %s18, 1
        %s126 = scalar_select %p125, %s18, 1
        %s127 = smul.addr %s126, 8
        %s128 = scalar_lea.vmem %s2, %s127
      $region24: #{tpu_custom_call.1} parent=15 // pred_fallthru
        _
    $region16: #{tpu_custom_call.1} parent=5 // pred_fallthru
      _
    %p129 = scmp.le.s32.totalorder 1, %s18
    %p130 = scmp.lt.s32.totalorder %s18, 3
    %p131 = pnand %p129, %p130
    %p132 = pneg %p131
    // Predicated region
    $region25: #{tpu_custom_call.1} parent=5 // pred_check
      _
    $region26: #{tpu_custom_call.1} parent=5 // pred_check_branch
      %134 = sbr.rel (%p131) target = $region28
    $region27: #{tpu_custom_call.1} parent=5 // pred_region
      %s135 = ssub.s32 %s18, 1
      %p136 = scmp.lt.s32.totalorder %s23, 1
      %s137 = scalar_select %p136, %s23, 1
      %s138 = smul.addr %s137, 8
      %s139 = scalar_lea.vmem %s1, %s138
      %p140 = pneg %p44
      %p141 = pneg %p41
      %p142 = scmp.lt.s32.totalorder %s23, 1
      %s143 = scalar_select %p142, %s23, 1
      %s144 = smul.addr %s143, 8
      %s145 = scalar_lea.vmem %s2, %s144
      %p146 = pneg %p70
      %p147 = pneg %p67
      %p148 = pneg %p96
      %p149 = pneg %p93
      %p150 = scmp.lt.s32.totalorder %s23, 1
      %s151 = scalar_select %p150, %s23, 1
      %s152 = smul.addr %s151, 8
      %s153 = scalar_lea.vmem %s4, %s152
      %p154 = scmp.lt.s32.totalorder %s23, 1
      %s155 = scalar_select %p154, %s23, 1
      %s156 = smul.addr %s155, 8
      %s157 = scalar_lea.vmem %s1, %s156
      %p158 = scmp.lt.s32.totalorder %s23, 1
      %s159 = scalar_select %p158, %s23, 1
      %s160 = smul.addr %s159, 8
      %s161 = scalar_lea.vmem %s2, %s160
      %p162 = scmp.lt.s32.totalorder %s23, 1
      %s163 = scalar_select %p162, %s23, 1
      %s164 = smul.addr %s163, 8
      %s165 = scalar_lea.vmem %s4, %s164
      %s166 = smul.u32 %s23, 8
      %s167 = sld [smem:[#allocation6 + %s166]]
      %s168 = sadd.s32 %s166, 1
      %s169 = sld [smem:[#allocation6 + %s168]]
      %s170 = sadd.s32 %s166, 2
      %s171 = sld [smem:[#allocation6 + %s170]]
      %s172 = sadd.s32 %s166, 3
      %s173 = sld [smem:[#allocation6 + %s172]]
      %s174 = sadd.s32 %s166, 4
      %s175 = sld [smem:[#allocation6 + %s174]]
      %s176 = sadd.s32 %s166, 5
      %s177 = sld [smem:[#allocation6 + %s176]]
      %s178 = sadd.s32 %s166, 6
      %s179 = sld [smem:[#allocation6 + %s178]]
      %s180 = sadd.s32 %s166, 7
      %s181 = sld [smem:[#allocation6 + %s180]]
      %s182 = scalar_lea.vmem %s3, %s167
      %p184 = scmp.lt.u32.totalorder 1, 8
      %p185 = pneg %p184
      // Predicated region
      $region29: #{tpu_custom_call.1} parent=27 // pred_check
        _
      $region30: #{tpu_custom_call.1} parent=27 // pred_check_branch
        %187 = sbr.rel (%p184) target = $region32
      $region31: #{tpu_custom_call.1} parent=27 // pred_region
        %s203 = sand.u32 1, 7
        %p204 = scmp.eq.s32.totalorder %s203, 0
        %p205 = pneg %p204
        // Predicated region
        $region44: #{tpu_custom_call.1} parent=31 // pred_check
          _
        $region45: #{tpu_custom_call.1} parent=31 // pred_check_branch
          %207 = sbr.rel (%p204) target = $region47
        $region46: #{tpu_custom_call.1} parent=31 // pred_region
          %s208 = sand.u32 1, 7
          %s209 = ssub.s32 1, %s208
          %s210 = scalar_lea.vmem %s182, %s209
          %s211 = ssub.s32 1, %s208
          %s212 = scalar_lea.vmem [#allocation2], %s211
          %s213 = sshll.u32 1, %s208
          %s214 = ssub.s32 %s213, 1
          loop: start=0, step=1, limit=1
          $region48: #{tpu_custom_call.1} parent=46 // loop_pre_header
            _
          $region49: #{tpu_custom_call.1} parent=46 // loop_header
            %s216 = sphi 0, %s220
            %p217 = scmp.ge.s32.totalorder %s216, 1
            %s221 = sphi %s210, %s210
            %s222 = sphi %s212, %s212
          $region50: #{tpu_custom_call.1} parent=46 // loop_header_branch
            %219 = sbr.rel (%p217) target = $region54
          $region51: #{tpu_custom_call.1} parent=46 // loop_body
            %v223 = vld [vmem:[%s221] sm:%s214]
            %224 = vst [vmem:[%s222] sm:%s214] %v223
          $region52: #{tpu_custom_call.1} parent=46 // loop_footer
            %s220 = sadd.s32 1, %s216
          $region53: #{tpu_custom_call.1} parent=46 // loop_footer_branch
            %215 = sbr.rel target = $region49
          $region54: #{tpu_custom_call.1} parent=46 // loop_exit
            _
        $region47: #{tpu_custom_call.1} parent=31 // pred_fallthru
          _
      $region32: #{tpu_custom_call.1} parent=27 // pred_fallthru
        _
      // Predicated region
      $region33: #{tpu_custom_call.1} parent=27 // pred_check
        %p188 = pneg %p184
      $region34: #{tpu_custom_call.1} parent=27 // pred_check_branch
        %190 = sbr.rel (%p188) target = $region36
      $region35: #{tpu_custom_call.1} parent=27 // pred_region
        %s191 = sshll.u32 1, 1
        %s192 = ssub.s32 %s191, 1
        loop: start=0, step=1, limit=1
        $region37: #{tpu_custom_call.1} parent=35 // loop_pre_header
          _
        $region38: #{tpu_custom_call.1} parent=35 // loop_header
          %s194 = sphi 0, %s198
          %p195 = scmp.ge.s32.totalorder %s194, 1
          %s199 = sphi %s182, %s182
          %s200 = sphi [#allocation2], [#allocation2]
        $region39: #{tpu_custom_call.1} parent=35 // loop_header_branch
          %197 = sbr.rel (%p195) target = $region43
        $region40: #{tpu_custom_call.1} parent=35 // loop_body
          %v201 = vld [vmem:[%s199] sm:%s192]
          %202 = vst [vmem:[%s200] sm:%s192] %v201
        $region41: #{tpu_custom_call.1} parent=35 // loop_footer
          %s198 = sadd.s32 1, %s194
        $region42: #{tpu_custom_call.1} parent=35 // loop_footer_branch
          %193 = sbr.rel target = $region38
        $region43: #{tpu_custom_call.1} parent=35 // loop_exit
          _
      $region36: #{tpu_custom_call.1} parent=27 // pred_fallthru
        _
      // Predicated region
      $region55: #{tpu_custom_call.1} parent=27 // pred_check
        _
      $region56: #{tpu_custom_call.1} parent=27 // pred_check_branch
        %227 = sbr.rel (0) target = $region58
      $region57: #{tpu_custom_call.1} parent=27 // pred_region
        %228 = vsyncadd [#allocation3], 16
      $region58: #{tpu_custom_call.1} parent=27 // pred_fallthru
        _
      %s229 = scalar_lea.vmem %s3, %s169
      %s230 = scalar_lea.vmem [#allocation2], 1
      %s231 = scalar_lea.sflag [#allocation3], 1
      %p233 = scmp.lt.u32.totalorder 1, 8
      %p234 = pneg %p233
      // Predicated region
      $region59: #{tpu_custom_call.1} parent=27 // pred_check
        _
      $region60: #{tpu_custom_call.1} parent=27 // pred_check_branch
        %236 = sbr.rel (%p233) target = $region62
      $region61: #{tpu_custom_call.1} parent=27 // pred_region
        %s252 = sand.u32 1, 7
        %p253 = scmp.eq.s32.totalorder %s252, 0
        %p254 = pneg %p253
        // Predicated region
        $region74: #{tpu_custom_call.1} parent=61 // pred_check
          _
        $region75: #{tpu_custom_call.1} parent=61 // pred_check_branch
          %256 = sbr.rel (%p253) target = $region77
        $region76: #{tpu_custom_call.1} parent=61 // pred_region
          %s257 = sand.u32 1, 7
          %s258 = ssub.s32 1, %s257
          %s259 = scalar_lea.vmem %s229, %s258
          %s260 = ssub.s32 1, %s257
          %s261 = scalar_lea.vmem %s230, %s260 [#allocation2]
          %s262 = sshll.u32 1, %s257
          %s263 = ssub.s32 %s262, 1
          loop: start=0, step=1, limit=1
          $region78: #{tpu_custom_call.1} parent=76 // loop_pre_header
            _
          $region79: #{tpu_custom_call.1} parent=76 // loop_header
            %s265 = sphi 0, %s269
            %p266 = scmp.ge.s32.totalorder %s265, 1
            %s270 = sphi %s259, %s259
            %s271 = sphi %s261, %s261
          $region80: #{tpu_custom_call.1} parent=76 // loop_header_branch
            %268 = sbr.rel (%p266) target = $region84
          $region81: #{tpu_custom_call.1} parent=76 // loop_body
            %v272 = vld [vmem:[%s270] sm:%s263]
            %273 = vst [vmem:[%s271] sm:%s263] %v272
          $region82: #{tpu_custom_call.1} parent=76 // loop_footer
            %s269 = sadd.s32 1, %s265
          $region83: #{tpu_custom_call.1} parent=76 // loop_footer_branch
            %264 = sbr.rel target = $region79
          $region84: #{tpu_custom_call.1} parent=76 // loop_exit
            _
        $region77: #{tpu_custom_call.1} parent=61 // pred_fallthru
          _
      $region62: #{tpu_custom_call.1} parent=27 // pred_fallthru
        _
      // Predicated region
      $region63: #{tpu_custom_call.1} parent=27 // pred_check
        %p237 = pneg %p233
      $region64: #{tpu_custom_call.1} parent=27 // pred_check_branch
        %239 = sbr.rel (%p237) target = $region66
      $region65: #{tpu_custom_call.1} parent=27 // pred_region
        %s240 = sshll.u32 1, 1
        %s241 = ssub.s32 %s240, 1
        loop: start=0, step=1, limit=1
        $region67: #{tpu_custom_call.1} parent=65 // loop_pre_header
          _
        $region68: #{tpu_custom_call.1} parent=65 // loop_header
          %s243 = sphi 0, %s247
          %p244 = scmp.ge.s32.totalorder %s243, 1
          %s248 = sphi %s229, %s229
          %s249 = sphi %s230, %s230
        $region69: #{tpu_custom_call.1} parent=65 // loop_header_branch
          %246 = sbr.rel (%p244) target = $region73
        $region70: #{tpu_custom_call.1} parent=65 // loop_body
          %v250 = vld [vmem:[%s248] sm:%s241]
          %251 = vst [vmem:[%s249] sm:%s241] %v250
        $region71: #{tpu_custom_call.1} parent=65 // loop_footer
          %s247 = sadd.s32 1, %s243
        $region72: #{tpu_custom_call.1} parent=65 // loop_footer_branch
          %242 = sbr.rel target = $region68
        $region73: #{tpu_custom_call.1} parent=65 // loop_exit
          _
      $region66: #{tpu_custom_call.1} parent=27 // pred_fallthru
        _
      // Predicated region
      $region85: #{tpu_custom_call.1} parent=27 // pred_check
        _
      $region86: #{tpu_custom_call.1} parent=27 // pred_check_branch
        %276 = sbr.rel (0) target = $region88
      $region87: #{tpu_custom_call.1} parent=27 // pred_region
        %277 = vsyncadd %s231, 16
      $region88: #{tpu_custom_call.1} parent=27 // pred_fallthru
        _
      %s278 = scalar_lea.vmem %s3, %s171
      %s279 = scalar_lea.vmem [#allocation2], 2
      %s280 = scalar_lea.sflag [#allocation3], 2
      %p282 = scmp.lt.u32.totalorder 1, 8
      %p283 = pneg %p282
      // Predicated region
      $region89: #{tpu_custom_call.1} parent=27 // pred_check
        _
      $region90: #{tpu_custom_call.1} parent=27 // pred_check_branch
        %285 = sbr.rel (%p282) target = $region92
      $region91: #{tpu_custom_call.1} parent=27 // pred_region
        %s301 = sand.u32 1, 7
        %p302 = scmp.eq.s32.totalorder %s301, 0
        %p303 = pneg %p302
        // Predicated region
        $region104: #{tpu_custom_call.1} parent=91 // pred_check
          _
        $region105: #{tpu_custom_call.1} parent=91 // pred_check_branch
          %305 = sbr.rel (%p302) target = $region107
        $region106: #{tpu_custom_call.1} parent=91 // pred_region
          %s306 = sand.u32 1, 7
          %s307 = ssub.s32 1, %s306
          %s308 = scalar_lea.vmem %s278, %s307
          %s309 = ssub.s32 1, %s306
          %s310 = scalar_lea.vmem %s279, %s309 [#allocation2]
          %s311 = sshll.u32 1, %s306
          %s312 = ssub.s32 %s311, 1
          loop: start=0, step=1, limit=1
          $region108: #{tpu_custom_call.1} parent=106 // loop_pre_header
            _
          $region109: #{tpu_custom_call.1} parent=106 // loop_header
            %s314 = sphi 0, %s318
            %p315 = scmp.ge.s32.totalorder %s314, 1
            %s319 = sphi %s308, %s308
            %s320 = sphi %s310, %s310
          $region110: #{tpu_custom_call.1} parent=106 // loop_header_branch
            %317 = sbr.rel (%p315) target = $region114
          $region111: #{tpu_custom_call.1} parent=106 // loop_body
            %v321 = vld [vmem:[%s319] sm:%s312]
            %322 = vst [vmem:[%s320] sm:%s312] %v321
          $region112: #{tpu_custom_call.1} parent=106 // loop_footer
            %s318 = sadd.s32 1, %s314
          $region113: #{tpu_custom_call.1} parent=106 // loop_footer_branch
            %313 = sbr.rel target = $region109
          $region114: #{tpu_custom_call.1} parent=106 // loop_exit
            _
        $region107: #{tpu_custom_call.1} parent=91 // pred_fallthru
          _
      $region92: #{tpu_custom_call.1} parent=27 // pred_fallthru
        _
      // Predicated region
      $region93: #{tpu_custom_call.1} parent=27 // pred_check
        %p286 = pneg %p282
      $region94: #{tpu_custom_call.1} parent=27 // pred_check_branch
        %288 = sbr.rel (%p286) target = $region96
      $region95: #{tpu_custom_call.1} parent=27 // pred_region
        %s289 = sshll.u32 1, 1
        %s290 = ssub.s32 %s289, 1
        loop: start=0, step=1, limit=1
        $region97: #{tpu_custom_call.1} parent=95 // loop_pre_header
          _
        $region98: #{tpu_custom_call.1} parent=95 // loop_header
          %s292 = sphi 0, %s296
          %p293 = scmp.ge.s32.totalorder %s292, 1
          %s297 = sphi %s278, %s278
          %s298 = sphi %s279, %s279
        $region99: #{tpu_custom_call.1} parent=95 // loop_header_branch
          %295 = sbr.rel (%p293) target = $region103
        $region100: #{tpu_custom_call.1} parent=95 // loop_body
          %v299 = vld [vmem:[%s297] sm:%s290]
          %300 = vst [vmem:[%s298] sm:%s290] %v299
        $region101: #{tpu_custom_call.1} parent=95 // loop_footer
          %s296 = sadd.s32 1, %s292
        $region102: #{tpu_custom_call.1} parent=95 // loop_footer_branch
          %291 = sbr.rel target = $region98
        $region103: #{tpu_custom_call.1} parent=95 // loop_exit
          _
      $region96: #{tpu_custom_call.1} parent=27 // pred_fallthru
        _
      // Predicated region
      $region115: #{tpu_custom_call.1} parent=27 // pred_check
        _
      $region116: #{tpu_custom_call.1} parent=27 // pred_check_branch
        %325 = sbr.rel (0) target = $region118
      $region117: #{tpu_custom_call.1} parent=27 // pred_region
        %326 = vsyncadd %s280, 16
      $region118: #{tpu_custom_call.1} parent=27 // pred_fallthru
        _
      %s327 = scalar_lea.vmem %s3, %s173
      %s328 = scalar_lea.vmem [#allocation2], 3
      %s329 = scalar_lea.sflag [#allocation3], 3
      %p331 = scmp.lt.u32.totalorder 1, 8
      %p332 = pneg %p331
      // Predicated region
      $region119: #{tpu_custom_call.1} parent=27 // pred_check
        _
      $region120: #{tpu_custom_call.1} parent=27 // pred_check_branch
        %334 = sbr.rel (%p331) target = $region122
      $region121: #{tpu_custom_call.1} parent=27 // pred_region
        %s350 = sand.u32 1, 7
        %p351 = scmp.eq.s32.totalorder %s350, 0
        %p352 = pneg %p351
        // Predicated region
        $region134: #{tpu_custom_call.1} parent=121 // pred_check
          _
        $region135: #{tpu_custom_call.1} parent=121 // pred_check_branch
          %354 = sbr.rel (%p351) target = $region137
        $region136: #{tpu_custom_call.1} parent=121 // pred_region
          %s355 = sand.u32 1, 7
          %s356 = ssub.s32 1, %s355
          %s357 = scalar_lea.vmem %s327, %s356
          %s358 = ssub.s32 1, %s355
          %s359 = scalar_lea.vmem %s328, %s358 [#allocation2]
          %s360 = sshll.u32 1, %s355
          %s361 = ssub.s32 %s360, 1
          loop: start=0, step=1, limit=1
          $region138: #{tpu_custom_call.1} parent=136 // loop_pre_header
            _
          $region139: #{tpu_custom_call.1} parent=136 // loop_header
            %s363 = sphi 0, %s367
            %p364 = scmp.ge.s32.totalorder %s363, 1
            %s368 = sphi %s357, %s357
            %s369 = sphi %s359, %s359
          $region140: #{tpu_custom_call.1} parent=136 // loop_header_branch
            %366 = sbr.rel (%p364) target = $region144
          $region141: #{tpu_custom_call.1} parent=136 // loop_body
            %v370 = vld [vmem:[%s368] sm:%s361]
            %371 = vst [vmem:[%s369] sm:%s361] %v370
          $region142: #{tpu_custom_call.1} parent=136 // loop_footer
            %s367 = sadd.s32 1, %s363
          $region143: #{tpu_custom_call.1} parent=136 // loop_footer_branch
            %362 = sbr.rel target = $region139
          $region144: #{tpu_custom_call.1} parent=136 // loop_exit
            _
        $region137: #{tpu_custom_call.1} parent=121 // pred_fallthru
          _
      $region122: #{tpu_custom_call.1} parent=27 // pred_fallthru
        _
      // Predicated region
      $region123: #{tpu_custom_call.1} parent=27 // pred_check
        %p335 = pneg %p331
      $region124: #{tpu_custom_call.1} parent=27 // pred_check_branch
        %337 = sbr.rel (%p335) target = $region126
      $region125: #{tpu_custom_call.1} parent=27 // pred_region
        %s338 = sshll.u32 1, 1
        %s339 = ssub.s32 %s338, 1
        loop: start=0, step=1, limit=1
        $region127: #{tpu_custom_call.1} parent=125 // loop_pre_header
          _
        $region128: #{tpu_custom_call.1} parent=125 // loop_header
          %s341 = sphi 0, %s345
          %p342 = scmp.ge.s32.totalorder %s341, 1
          %s346 = sphi %s327, %s327
          %s347 = sphi %s328, %s328
        $region129: #{tpu_custom_call.1} parent=125 // loop_header_branch
          %344 = sbr.rel (%p342) target = $region133
        $region130: #{tpu_custom_call.1} parent=125 // loop_body
          %v348 = vld [vmem:[%s346] sm:%s339]
          %349 = vst [vmem:[%s347] sm:%s339] %v348
        $region131: #{tpu_custom_call.1} parent=125 // loop_footer
          %s345 = sadd.s32 1, %s341
        $region132: #{tpu_custom_call.1} parent=125 // loop_footer_branch
          %340 = sbr.rel target = $region128
        $region133: #{tpu_custom_call.1} parent=125 // loop_exit
          _
      $region126: #{tpu_custom_call.1} parent=27 // pred_fallthru
        _
      // Predicated region
      $region145: #{tpu_custom_call.1} parent=27 // pred_check
        _
      $region146: #{tpu_custom_call.1} parent=27 // pred_check_branch
        %374 = sbr.rel (0) target = $region148
      $region147: #{tpu_custom_call.1} parent=27 // pred_region
        %375 = vsyncadd %s329, 16
      $region148: #{tpu_custom_call.1} parent=27 // pred_fallthru
        _
      %s376 = scalar_lea.vmem %s3, %s175
      %s377 = scalar_lea.vmem [#allocation2], 4
      %s378 = scalar_lea.sflag [#allocation3], 4
      %p380 = scmp.lt.u32.totalorder 1, 8
      %p381 = pneg %p380
      // Predicated region
      $region149: #{tpu_custom_call.1} parent=27 // pred_check
        _
      $region150: #{tpu_custom_call.1} parent=27 // pred_check_branch
        %383 = sbr.rel (%p380) target = $region152
      $region151: #{tpu_custom_call.1} parent=27 // pred_region
        %s399 = sand.u32 1, 7
        %p400 = scmp.eq.s32.totalorder %s399, 0
        %p401 = pneg %p400
        // Predicated region
        $region164: #{tpu_custom_call.1} parent=151 // pred_check
          _
        $region165: #{tpu_custom_call.1} parent=151 // pred_check_branch
          %403 = sbr.rel (%p400) target = $region167
        $region166: #{tpu_custom_call.1} parent=151 // pred_region
          %s404 = sand.u32 1, 7
          %s405 = ssub.s32 1, %s404
          %s406 = scalar_lea.vmem %s376, %s405
          %s407 = ssub.s32 1, %s404
          %s408 = scalar_lea.vmem %s377, %s407 [#allocation2]
          %s409 = sshll.u32 1, %s404
          %s410 = ssub.s32 %s409, 1
          loop: start=0, step=1, limit=1
          $region168: #{tpu_custom_call.1} parent=166 // loop_pre_header
            _
          $region169: #{tpu_custom_call.1} parent=166 // loop_header
            %s412 = sphi 0, %s416
            %p413 = scmp.ge.s32.totalorder %s412, 1
            %s417 = sphi %s406, %s406
            %s418 = sphi %s408, %s408
          $region170: #{tpu_custom_call.1} parent=166 // loop_header_branch
            %415 = sbr.rel (%p413) target = $region174
          $region171: #{tpu_custom_call.1} parent=166 // loop_body
            %v419 = vld [vmem:[%s417] sm:%s410]
            %420 = vst [vmem:[%s418] sm:%s410] %v419
          $region172: #{tpu_custom_call.1} parent=166 // loop_footer
            %s416 = sadd.s32 1, %s412
          $region173: #{tpu_custom_call.1} parent=166 // loop_footer_branch
            %411 = sbr.rel target = $region169
          $region174: #{tpu_custom_call.1} parent=166 // loop_exit
            _
        $region167: #{tpu_custom_call.1} parent=151 // pred_fallthru
          _
      $region152: #{tpu_custom_call.1} parent=27 // pred_fallthru
        _
      // Predicated region
      $region153: #{tpu_custom_call.1} parent=27 // pred_check
        %p384 = pneg %p380
      $region154: #{tpu_custom_call.1} parent=27 // pred_check_branch
        %386 = sbr.rel (%p384) target = $region156
      $region155: #{tpu_custom_call.1} parent=27 // pred_region
        %s387 = sshll.u32 1, 1
        %s388 = ssub.s32 %s387, 1
        loop: start=0, step=1, limit=1
        $region157: #{tpu_custom_call.1} parent=155 // loop_pre_header
          _
        $region158: #{tpu_custom_call.1} parent=155 // loop_header
          %s390 = sphi 0, %s394
          %p391 = scmp.ge.s32.totalorder %s390, 1
          %s395 = sphi %s376, %s376
          %s396 = sphi %s377, %s377
        $region159: #{tpu_custom_call.1} parent=155 // loop_header_branch
          %393 = sbr.rel (%p391) target = $region163
        $region160: #{tpu_custom_call.1} parent=155 // loop_body
          %v397 = vld [vmem:[%s395] sm:%s388]
          %398 = vst [vmem:[%s396] sm:%s388] %v397
        $region161: #{tpu_custom_call.1} parent=155 // loop_footer
          %s394 = sadd.s32 1, %s390
        $region162: #{tpu_custom_call.1} parent=155 // loop_footer_branch
          %389 = sbr.rel target = $region158
        $region163: #{tpu_custom_call.1} parent=155 // loop_exit
          _
      $region156: #{tpu_custom_call.1} parent=27 // pred_fallthru
        _
      // Predicated region
      $region175: #{tpu_custom_call.1} parent=27 // pred_check
        _
      $region176: #{tpu_custom_call.1} parent=27 // pred_check_branch
        %423 = sbr.rel (0) target = $region178
      $region177: #{tpu_custom_call.1} parent=27 // pred_region
        %424 = vsyncadd %s378, 16
      $region178: #{tpu_custom_call.1} parent=27 // pred_fallthru
        _
      %s425 = scalar_lea.vmem %s3, %s177
      %s426 = scalar_lea.vmem [#allocation2], 5
      %s427 = scalar_lea.sflag [#allocation3], 5
      %p429 = scmp.lt.u32.totalorder 1, 8
      %p430 = pneg %p429
      // Predicated region
      $region179: #{tpu_custom_call.1} parent=27 // pred_check
        _
      $region180: #{tpu_custom_call.1} parent=27 // pred_check_branch
        %432 = sbr.rel (%p429) target = $region182
      $region181: #{tpu_custom_call.1} parent=27 // pred_region
        %s448 = sand.u32 1, 7
        %p449 = scmp.eq.s32.totalorder %s448, 0
        %p450 = pneg %p449
        // Predicated region
        $region194: #{tpu_custom_call.1} parent=181 // pred_check
          _
        $region195: #{tpu_custom_call.1} parent=181 // pred_check_branch
          %452 = sbr.rel (%p449) target = $region197
        $region196: #{tpu_custom_call.1} parent=181 // pred_region
          %s453 = sand.u32 1, 7
          %s454 = ssub.s32 1, %s453
          %s455 = scalar_lea.vmem %s425, %s454
          %s456 = ssub.s32 1, %s453
          %s457 = scalar_lea.vmem %s426, %s456 [#allocation2]
          %s458 = sshll.u32 1, %s453
          %s459 = ssub.s32 %s458, 1
          loop: start=0, step=1, limit=1
          $region198: #{tpu_custom_call.1} parent=196 // loop_pre_header
            _
          $region199: #{tpu_custom_call.1} parent=196 // loop_header
            %s461 = sphi 0, %s465
            %p462 = scmp.ge.s32.totalorder %s461, 1
            %s466 = sphi %s455, %s455
            %s467 = sphi %s457, %s457
          $region200: #{tpu_custom_call.1} parent=196 // loop_header_branch
            %464 = sbr.rel (%p462) target = $region204
          $region201: #{tpu_custom_call.1} parent=196 // loop_body
            %v468 = vld [vmem:[%s466] sm:%s459]
            %469 = vst [vmem:[%s467] sm:%s459] %v468
          $region202: #{tpu_custom_call.1} parent=196 // loop_footer
            %s465 = sadd.s32 1, %s461
          $region203: #{tpu_custom_call.1} parent=196 // loop_footer_branch
            %460 = sbr.rel target = $region199
          $region204: #{tpu_custom_call.1} parent=196 // loop_exit
            _
        $region197: #{tpu_custom_call.1} parent=181 // pred_fallthru
          _
      $region182: #{tpu_custom_call.1} parent=27 // pred_fallthru
        _
      // Predicated region
      $region183: #{tpu_custom_call.1} parent=27 // pred_check
        %p433 = pneg %p429
      $region184: #{tpu_custom_call.1} parent=27 // pred_check_branch
        %435 = sbr.rel (%p433) target = $region186
      $region185: #{tpu_custom_call.1} parent=27 // pred_region
        %s436 = sshll.u32 1, 1
        %s437 = ssub.s32 %s436, 1
        loop: start=0, step=1, limit=1
        $region187: #{tpu_custom_call.1} parent=185 // loop_pre_header
          _
        $region188: #{tpu_custom_call.1} parent=185 // loop_header
          %s439 = sphi 0, %s443
          %p440 = scmp.ge.s32.totalorder %s439, 1
          %s444 = sphi %s425, %s425
          %s445 = sphi %s426, %s426
        $region189: #{tpu_custom_call.1} parent=185 // loop_header_branch
          %442 = sbr.rel (%p440) target = $region193
        $region190: #{tpu_custom_call.1} parent=185 // loop_body
          %v446 = vld [vmem:[%s444] sm:%s437]
          %447 = vst [vmem:[%s445] sm:%s437] %v446
        $region191: #{tpu_custom_call.1} parent=185 // loop_footer
          %s443 = sadd.s32 1, %s439
        $region192: #{tpu_custom_call.1} parent=185 // loop_footer_branch
          %438 = sbr.rel target = $region188
        $region193: #{tpu_custom_call.1} parent=185 // loop_exit
          _
      $region186: #{tpu_custom_call.1} parent=27 // pred_fallthru
        _
      // Predicated region
      $region205: #{tpu_custom_call.1} parent=27 // pred_check
        _
      $region206: #{tpu_custom_call.1} parent=27 // pred_check_branch
        %472 = sbr.rel (0) target = $region208
      $region207: #{tpu_custom_call.1} parent=27 // pred_region
        %473 = vsyncadd %s427, 16
      $region208: #{tpu_custom_call.1} parent=27 // pred_fallthru
        _
      %s474 = scalar_lea.vmem %s3, %s179
      %s475 = scalar_lea.vmem [#allocation2], 6
      %s476 = scalar_lea.sflag [#allocation3], 6
      %p478 = scmp.lt.u32.totalorder 1, 8
      %p479 = pneg %p478
      // Predicated region
      $region209: #{tpu_custom_call.1} parent=27 // pred_check
        _
      $region210: #{tpu_custom_call.1} parent=27 // pred_check_branch
        %481 = sbr.rel (%p478) target = $region212
      $region211: #{tpu_custom_call.1} parent=27 // pred_region
        %s497 = sand.u32 1, 7
        %p498 = scmp.eq.s32.totalorder %s497, 0
        %p499 = pneg %p498
        // Predicated region
        $region224: #{tpu_custom_call.1} parent=211 // pred_check
          _
        $region225: #{tpu_custom_call.1} parent=211 // pred_check_branch
          %501 = sbr.rel (%p498) target = $region227
        $region226: #{tpu_custom_call.1} parent=211 // pred_region
          %s502 = sand.u32 1, 7
          %s503 = ssub.s32 1, %s502
          %s504 = scalar_lea.vmem %s474, %s503
          %s505 = ssub.s32 1, %s502
          %s506 = scalar_lea.vmem %s475, %s505 [#allocation2]
          %s507 = sshll.u32 1, %s502
          %s508 = ssub.s32 %s507, 1
          loop: start=0, step=1, limit=1
          $region228: #{tpu_custom_call.1} parent=226 // loop_pre_header
            _
          $region229: #{tpu_custom_call.1} parent=226 // loop_header
            %s510 = sphi 0, %s514
            %p511 = scmp.ge.s32.totalorder %s510, 1
            %s515 = sphi %s504, %s504
            %s516 = sphi %s506, %s506
          $region230: #{tpu_custom_call.1} parent=226 // loop_header_branch
            %513 = sbr.rel (%p511) target = $region234
          $region231: #{tpu_custom_call.1} parent=226 // loop_body
            %v517 = vld [vmem:[%s515] sm:%s508]
            %518 = vst [vmem:[%s516] sm:%s508] %v517
          $region232: #{tpu_custom_call.1} parent=226 // loop_footer
            %s514 = sadd.s32 1, %s510
          $region233: #{tpu_custom_call.1} parent=226 // loop_footer_branch
            %509 = sbr.rel target = $region229
          $region234: #{tpu_custom_call.1} parent=226 // loop_exit
            _
        $region227: #{tpu_custom_call.1} parent=211 // pred_fallthru
          _
      $region212: #{tpu_custom_call.1} parent=27 // pred_fallthru
        _
      // Predicated region
      $region213: #{tpu_custom_call.1} parent=27 // pred_check
        %p482 = pneg %p478
      $region214: #{tpu_custom_call.1} parent=27 // pred_check_branch
        %484 = sbr.rel (%p482) target = $region216
      $region215: #{tpu_custom_call.1} parent=27 // pred_region
        %s485 = sshll.u32 1, 1
        %s486 = ssub.s32 %s485, 1
        loop: start=0, step=1, limit=1
        $region217: #{tpu_custom_call.1} parent=215 // loop_pre_header
          _
        $region218: #{tpu_custom_call.1} parent=215 // loop_header
          %s488 = sphi 0, %s492
          %p489 = scmp.ge.s32.totalorder %s488, 1
          %s493 = sphi %s474, %s474
          %s494 = sphi %s475, %s475
        $region219: #{tpu_custom_call.1} parent=215 // loop_header_branch
          %491 = sbr.rel (%p489) target = $region223
        $region220: #{tpu_custom_call.1} parent=215 // loop_body
          %v495 = vld [vmem:[%s493] sm:%s486]
          %496 = vst [vmem:[%s494] sm:%s486] %v495
        $region221: #{tpu_custom_call.1} parent=215 // loop_footer
          %s492 = sadd.s32 1, %s488
        $region222: #{tpu_custom_call.1} parent=215 // loop_footer_branch
          %487 = sbr.rel target = $region218
        $region223: #{tpu_custom_call.1} parent=215 // loop_exit
          _
      $region216: #{tpu_custom_call.1} parent=27 // pred_fallthru
        _
      // Predicated region
      $region235: #{tpu_custom_call.1} parent=27 // pred_check
        _
      $region236: #{tpu_custom_call.1} parent=27 // pred_check_branch
        %521 = sbr.rel (0) target = $region238
      $region237: #{tpu_custom_call.1} parent=27 // pred_region
        %522 = vsyncadd %s476, 16
      $region238: #{tpu_custom_call.1} parent=27 // pred_fallthru
        _
      %s523 = scalar_lea.vmem %s3, %s181
      %s524 = scalar_lea.vmem [#allocation2], 7
      %s525 = scalar_lea.sflag [#allocation3], 7
      %p527 = scmp.lt.u32.totalorder 1, 8
      %p528 = pneg %p527
      // Predicated region
      $region239: #{tpu_custom_call.1} parent=27 // pred_check
        _
      $region240: #{tpu_custom_call.1} parent=27 // pred_check_branch
        %530 = sbr.rel (%p527) target = $region242
      $region241: #{tpu_custom_call.1} parent=27 // pred_region
        %s546 = sand.u32 1, 7
        %p547 = scmp.eq.s32.totalorder %s546, 0
        %p548 = pneg %p547
        // Predicated region
        $region254: #{tpu_custom_call.1} parent=241 // pred_check
          _
        $region255: #{tpu_custom_call.1} parent=241 // pred_check_branch
          %550 = sbr.rel (%p547) target = $region257
        $region256: #{tpu_custom_call.1} parent=241 // pred_region
          %s551 = sand.u32 1, 7
          %s552 = ssub.s32 1, %s551
          %s553 = scalar_lea.vmem %s523, %s552
          %s554 = ssub.s32 1, %s551
          %s555 = scalar_lea.vmem %s524, %s554 [#allocation2]
          %s556 = sshll.u32 1, %s551
          %s557 = ssub.s32 %s556, 1
          loop: start=0, step=1, limit=1
          $region258: #{tpu_custom_call.1} parent=256 // loop_pre_header
            _
          $region259: #{tpu_custom_call.1} parent=256 // loop_header
            %s559 = sphi 0, %s563
            %p560 = scmp.ge.s32.totalorder %s559, 1
            %s564 = sphi %s553, %s553
            %s565 = sphi %s555, %s555
          $region260: #{tpu_custom_call.1} parent=256 // loop_header_branch
            %562 = sbr.rel (%p560) target = $region264
          $region261: #{tpu_custom_call.1} parent=256 // loop_body
            %v566 = vld [vmem:[%s564] sm:%s557]
            %567 = vst [vmem:[%s565] sm:%s557] %v566
          $region262: #{tpu_custom_call.1} parent=256 // loop_footer
            %s563 = sadd.s32 1, %s559
          $region263: #{tpu_custom_call.1} parent=256 // loop_footer_branch
            %558 = sbr.rel target = $region259
          $region264: #{tpu_custom_call.1} parent=256 // loop_exit
            _
        $region257: #{tpu_custom_call.1} parent=241 // pred_fallthru
          _
      $region242: #{tpu_custom_call.1} parent=27 // pred_fallthru
        _
      // Predicated region
      $region243: #{tpu_custom_call.1} parent=27 // pred_check
        %p531 = pneg %p527
      $region244: #{tpu_custom_call.1} parent=27 // pred_check_branch
        %533 = sbr.rel (%p531) target = $region246
      $region245: #{tpu_custom_call.1} parent=27 // pred_region
        %s534 = sshll.u32 1, 1
        %s535 = ssub.s32 %s534, 1
        loop: start=0, step=1, limit=1
        $region247: #{tpu_custom_call.1} parent=245 // loop_pre_header
          _
        $region248: #{tpu_custom_call.1} parent=245 // loop_header
          %s537 = sphi 0, %s541
          %p538 = scmp.ge.s32.totalorder %s537, 1
          %s542 = sphi %s523, %s523
          %s543 = sphi %s524, %s524
        $region249: #{tpu_custom_call.1} parent=245 // loop_header_branch
          %540 = sbr.rel (%p538) target = $region253
        $region250: #{tpu_custom_call.1} parent=245 // loop_body
          %v544 = vld [vmem:[%s542] sm:%s535]
          %545 = vst [vmem:[%s543] sm:%s535] %v544
        $region251: #{tpu_custom_call.1} parent=245 // loop_footer
          %s541 = sadd.s32 1, %s537
        $region252: #{tpu_custom_call.1} parent=245 // loop_footer_branch
          %536 = sbr.rel target = $region248
        $region253: #{tpu_custom_call.1} parent=245 // loop_exit
          _
      $region246: #{tpu_custom_call.1} parent=27 // pred_fallthru
        _
      // Predicated region
      $region265: #{tpu_custom_call.1} parent=27 // pred_check
        _
      $region266: #{tpu_custom_call.1} parent=27 // pred_check_branch
        %570 = sbr.rel (0) target = $region268
      $region267: #{tpu_custom_call.1} parent=27 // pred_region
        %571 = vsyncadd %s525, 16
      $region268: #{tpu_custom_call.1} parent=27 // pred_fallthru
        _
      %s572 = smul.u32 1, 1
      %s573 = sshll.u32 %s572, 4
      %574 = dma.done [#allocation3], %s573
      %s575 = sshll.u32 %s572, 4
      %576 = dma.done %s231, %s575
      %s577 = sshll.u32 %s572, 4
      %578 = dma.done %s280, %s577
      %s579 = sshll.u32 %s572, 4
      %580 = dma.done %s329, %s579
      %s581 = sshll.u32 %s572, 4
      %582 = dma.done %s378, %s581
      %s583 = sshll.u32 %s572, 4
      %584 = dma.done %s427, %s583
      %s585 = sshll.u32 %s572, 4
      %586 = dma.done %s476, %s585
      %s587 = sshll.u32 %s572, 4
      %588 = dma.done %s525, %s587
      %v589 = vld [vmem:[%s157] sm:$0xff]
      %vm590 = vcmask 31744
      %v591 = vsel %vm590, %v589, -inf
      %592 = vmax.xlane.f32.xlu0 %v591
      %v593 = vpop.xlane.xlu0 %592
      %v594 = vsub.f32 %v589, %v593
      %v595 = vmul.f32 %v594, 1.442695
      %v596 = vpow.pop %v595
      %v597 = vsel %vm590, %v596, 0.0
      %598 = vadd.xlane.f32.xlu0 %v597
      %v599 = vpop.xlane.xlu0 %598
      %v600 = vrcp.pop %v599
      %v601 = vmul.f32 %v596, %v600
      %v602 = vmax.f32 %v601, 0.0001
      %v603 = vmin.f32 %v602, 0.9999
      %v604 = vsel %vm590, %v603, 0.0
      %605 = vadd.xlane.f32.xlu0 %v604
      %v606 = vpop.xlane.xlu0 %605
      %v607 = vrcp.pop %v606
      %v608 = vmul.f32 %v603, %v607
      %v609 = vld [vmem:[#allocation2] sm:$0xff]
      %v610 = vmul.f32 %v609, 0.7
      %v611 = vmul.f32 %v608, 0.3
      %v612 = vadd.f32 %v610, %v611
      %613 = vst.msk [vmem:[#allocation2] sm:$0xff] %vm590, %v612
      %v614 = vlaneseq
      %v615 = vand.u32 %v614, 127
      %v616 = vld [vmem:[%s161] sm:$0xff]
      %617 = vset.pattern.permute.xlu0 0
      %618 = vperm.xlu0 %617, %v616
      %v619 = vpop.permute.xlu0 %618
      %vm620 = vcmp.eq.s32.totalorder %v615, %v619
      %v621 = vsel %vm620, %v589, 0.0
      %v622 = vsel %vm590, %v621, 0.0
      %623 = vadd.xlane.f32.xlu0 %v622
      %v624 = vpop.xlane.xlu0 %623
      %v625 = vlog2.pop %v599
      %v626 = vmul.f32 %v625, 0.6931472
      %v627 = vadd.f32 %v626, %v593
      %v628 = vsub.f32 %v627, %v624
      %v629 = vmul.f32 %v612, %v603
      %v630 = vsel %vm590, %v629, 0.0
      %631 = vadd.xlane.f32.xlu0 %v630
      %v632 = vpop.xlane.xlu0 %631
      %v633 = vsub.f32 1.0, %v632
      %v634 = vlog2.pop %v633
      %v635 = vmul.f32 %v634, 0.6931472
      %v636 = vmul.f32 %v635, 0.5
      %v637 = vadd.f32 %v628, %v636
      %vm638 = vcmask 7168
      %639 = vst.msk [vmem:[%s165] sm:$0xff] %vm638, %v637
      %s640 = scalar_lea.vmem %s5, %s167
      %p642 = scmp.lt.u32.totalorder 1, 8
      %p643 = pneg %p642
      // Predicated region
      $region269: #{tpu_custom_call.1} parent=27 // pred_check
        _
      $region270: #{tpu_custom_call.1} parent=27 // pred_check_branch
        %645 = sbr.rel (%p642) target = $region272
      $region271: #{tpu_custom_call.1} parent=27 // pred_region
        %s661 = sand.u32 1, 7
        %p662 = scmp.eq.s32.totalorder %s661, 0
        %p663 = pneg %p662
        // Predicated region
        $region284: #{tpu_custom_call.1} parent=271 // pred_check
          _
        $region285: #{tpu_custom_call.1} parent=271 // pred_check_branch
          %665 = sbr.rel (%p662) target = $region287
        $region286: #{tpu_custom_call.1} parent=271 // pred_region
          %s666 = sand.u32 1, 7
          %s667 = ssub.s32 1, %s666
          %s668 = scalar_lea.vmem [#allocation2], %s667
          %s669 = ssub.s32 1, %s666
          %s670 = scalar_lea.vmem %s640, %s669
          %s671 = sshll.u32 1, %s666
          %s672 = ssub.s32 %s671, 1
          loop: start=0, step=1, limit=1
          $region288: #{tpu_custom_call.1} parent=286 // loop_pre_header
            _
          $region289: #{tpu_custom_call.1} parent=286 // loop_header
            %s674 = sphi 0, %s678
            %p675 = scmp.ge.s32.totalorder %s674, 1
            %s679 = sphi %s668, %s668
            %s680 = sphi %s670, %s670
          $region290: #{tpu_custom_call.1} parent=286 // loop_header_branch
            %677 = sbr.rel (%p675) target = $region294
          $region291: #{tpu_custom_call.1} parent=286 // loop_body
            %v681 = vld [vmem:[%s679] sm:%s672]
            %682 = vst [vmem:[%s680] sm:%s672] %v681
          $region292: #{tpu_custom_call.1} parent=286 // loop_footer
            %s678 = sadd.s32 1, %s674
          $region293: #{tpu_custom_call.1} parent=286 // loop_footer_branch
            %673 = sbr.rel target = $region289
          $region294: #{tpu_custom_call.1} parent=286 // loop_exit
            _
        $region287: #{tpu_custom_call.1} parent=271 // pred_fallthru
          _
      $region272: #{tpu_custom_call.1} parent=27 // pred_fallthru
        _
      // Predicated region
      $region273: #{tpu_custom_call.1} parent=27 // pred_check
        %p646 = pneg %p642
      $region274: #{tpu_custom_call.1} parent=27 // pred_check_branch
        %648 = sbr.rel (%p646) target = $region276
      $region275: #{tpu_custom_call.1} parent=27 // pred_region
        %s649 = sshll.u32 1, 1
        %s650 = ssub.s32 %s649, 1
        loop: start=0, step=1, limit=1
        $region277: #{tpu_custom_call.1} parent=275 // loop_pre_header
          _
        $region278: #{tpu_custom_call.1} parent=275 // loop_header
          %s652 = sphi 0, %s656
          %p653 = scmp.ge.s32.totalorder %s652, 1
          %s657 = sphi [#allocation2], [#allocation2]
          %s658 = sphi %s640, %s640
        $region279: #{tpu_custom_call.1} parent=275 // loop_header_branch
          %655 = sbr.rel (%p653) target = $region283
        $region280: #{tpu_custom_call.1} parent=275 // loop_body
          %v659 = vld [vmem:[%s657] sm:%s650]
          %660 = vst [vmem:[%s658] sm:%s650] %v659
        $region281: #{tpu_custom_call.1} parent=275 // loop_footer
          %s656 = sadd.s32 1, %s652
        $region282: #{tpu_custom_call.1} parent=275 // loop_footer_branch
          %651 = sbr.rel target = $region278
        $region283: #{tpu_custom_call.1} parent=275 // loop_exit
          _
      $region276: #{tpu_custom_call.1} parent=27 // pred_fallthru
        _
      // Predicated region
      $region295: #{tpu_custom_call.1} parent=27 // pred_check
        _
      $region296: #{tpu_custom_call.1} parent=27 // pred_check_branch
        %685 = sbr.rel (0) target = $region298
      $region297: #{tpu_custom_call.1} parent=27 // pred_region
        %686 = vsyncadd [#allocation4], 16
      $region298: #{tpu_custom_call.1} parent=27 // pred_fallthru
        _
      %s687 = scalar_lea.vmem %s5, %s169
      %s688 = scalar_lea.sflag [#allocation4], 1
      %p690 = scmp.lt.u32.totalorder 1, 8
      %p691 = pneg %p690
      // Predicated region
      $region299: #{tpu_custom_call.1} parent=27 // pred_check
        _
      $region300: #{tpu_custom_call.1} parent=27 // pred_check_branch
        %693 = sbr.rel (%p690) target = $region302
      $region301: #{tpu_custom_call.1} parent=27 // pred_region
        %s709 = sand.u32 1, 7
        %p710 = scmp.eq.s32.totalorder %s709, 0
        %p711 = pneg %p710
        // Predicated region
        $region314: #{tpu_custom_call.1} parent=301 // pred_check
          _
        $region315: #{tpu_custom_call.1} parent=301 // pred_check_branch
          %713 = sbr.rel (%p710) target = $region317
        $region316: #{tpu_custom_call.1} parent=301 // pred_region
          %s714 = sand.u32 1, 7
          %s715 = ssub.s32 1, %s714
          %s716 = scalar_lea.vmem %s230, %s715 [#allocation2]
          %s717 = ssub.s32 1, %s714
          %s718 = scalar_lea.vmem %s687, %s717
          %s719 = sshll.u32 1, %s714
          %s720 = ssub.s32 %s719, 1
          loop: start=0, step=1, limit=1
          $region318: #{tpu_custom_call.1} parent=316 // loop_pre_header
            _
          $region319: #{tpu_custom_call.1} parent=316 // loop_header
            %s722 = sphi 0, %s726
            %p723 = scmp.ge.s32.totalorder %s722, 1
            %s727 = sphi %s716, %s716
            %s728 = sphi %s718, %s718
          $region320: #{tpu_custom_call.1} parent=316 // loop_header_branch
            %725 = sbr.rel (%p723) target = $region324
          $region321: #{tpu_custom_call.1} parent=316 // loop_body
            %v729 = vld [vmem:[%s727] sm:%s720]
            %730 = vst [vmem:[%s728] sm:%s720] %v729
          $region322: #{tpu_custom_call.1} parent=316 // loop_footer
            %s726 = sadd.s32 1, %s722
          $region323: #{tpu_custom_call.1} parent=316 // loop_footer_branch
            %721 = sbr.rel target = $region319
          $region324: #{tpu_custom_call.1} parent=316 // loop_exit
            _
        $region317: #{tpu_custom_call.1} parent=301 // pred_fallthru
          _
      $region302: #{tpu_custom_call.1} parent=27 // pred_fallthru
        _
      // Predicated region
      $region303: #{tpu_custom_call.1} parent=27 // pred_check
        %p694 = pneg %p690
      $region304: #{tpu_custom_call.1} parent=27 // pred_check_branch
        %696 = sbr.rel (%p694) target = $region306
      $region305: #{tpu_custom_call.1} parent=27 // pred_region
        %s697 = sshll.u32 1, 1
        %s698 = ssub.s32 %s697, 1
        loop: start=0, step=1, limit=1
        $region307: #{tpu_custom_call.1} parent=305 // loop_pre_header
          _
        $region308: #{tpu_custom_call.1} parent=305 // loop_header
          %s700 = sphi 0, %s704
          %p701 = scmp.ge.s32.totalorder %s700, 1
          %s705 = sphi %s230, %s230
          %s706 = sphi %s687, %s687
        $region309: #{tpu_custom_call.1} parent=305 // loop_header_branch
          %703 = sbr.rel (%p701) target = $region313
        $region310: #{tpu_custom_call.1} parent=305 // loop_body
          %v707 = vld [vmem:[%s705] sm:%s698]
          %708 = vst [vmem:[%s706] sm:%s698] %v707
        $region311: #{tpu_custom_call.1} parent=305 // loop_footer
          %s704 = sadd.s32 1, %s700
        $region312: #{tpu_custom_call.1} parent=305 // loop_footer_branch
          %699 = sbr.rel target = $region308
        $region313: #{tpu_custom_call.1} parent=305 // loop_exit
          _
      $region306: #{tpu_custom_call.1} parent=27 // pred_fallthru
        _
      // Predicated region
      $region325: #{tpu_custom_call.1} parent=27 // pred_check
        _
      $region326: #{tpu_custom_call.1} parent=27 // pred_check_branch
        %733 = sbr.rel (0) target = $region328
      $region327: #{tpu_custom_call.1} parent=27 // pred_region
        %734 = vsyncadd %s688, 16
      $region328: #{tpu_custom_call.1} parent=27 // pred_fallthru
        _
      %s735 = scalar_lea.vmem %s5, %s171
      %s736 = scalar_lea.sflag [#allocation4], 2
      %p738 = scmp.lt.u32.totalorder 1, 8
      %p739 = pneg %p738
      // Predicated region
      $region329: #{tpu_custom_call.1} parent=27 // pred_check
        _
      $region330: #{tpu_custom_call.1} parent=27 // pred_check_branch
        %741 = sbr.rel (%p738) target = $region332
      $region331: #{tpu_custom_call.1} parent=27 // pred_region
        %s757 = sand.u32 1, 7
        %p758 = scmp.eq.s32.totalorder %s757, 0
        %p759 = pneg %p758
        // Predicated region
        $region344: #{tpu_custom_call.1} parent=331 // pred_check
          _
        $region345: #{tpu_custom_call.1} parent=331 // pred_check_branch
          %761 = sbr.rel (%p758) target = $region347
        $region346: #{tpu_custom_call.1} parent=331 // pred_region
          %s762 = sand.u32 1, 7
          %s763 = ssub.s32 1, %s762
          %s764 = scalar_lea.vmem %s279, %s763 [#allocation2]
          %s765 = ssub.s32 1, %s762
          %s766 = scalar_lea.vmem %s735, %s765
          %s767 = sshll.u32 1, %s762
          %s768 = ssub.s32 %s767, 1
          loop: start=0, step=1, limit=1
          $region348: #{tpu_custom_call.1} parent=346 // loop_pre_header
            _
          $region349: #{tpu_custom_call.1} parent=346 // loop_header
            %s770 = sphi 0, %s774
            %p771 = scmp.ge.s32.totalorder %s770, 1
            %s775 = sphi %s764, %s764
            %s776 = sphi %s766, %s766
          $region350: #{tpu_custom_call.1} parent=346 // loop_header_branch
            %773 = sbr.rel (%p771) target = $region354
          $region351: #{tpu_custom_call.1} parent=346 // loop_body
            %v777 = vld [vmem:[%s775] sm:%s768]
            %778 = vst [vmem:[%s776] sm:%s768] %v777
          $region352: #{tpu_custom_call.1} parent=346 // loop_footer
            %s774 = sadd.s32 1, %s770
          $region353: #{tpu_custom_call.1} parent=346 // loop_footer_branch
            %769 = sbr.rel target = $region349
          $region354: #{tpu_custom_call.1} parent=346 // loop_exit
            _
        $region347: #{tpu_custom_call.1} parent=331 // pred_fallthru
          _
      $region332: #{tpu_custom_call.1} parent=27 // pred_fallthru
        _
      // Predicated region
      $region333: #{tpu_custom_call.1} parent=27 // pred_check
        %p742 = pneg %p738
      $region334: #{tpu_custom_call.1} parent=27 // pred_check_branch
        %744 = sbr.rel (%p742) target = $region336
      $region335: #{tpu_custom_call.1} parent=27 // pred_region
        %s745 = sshll.u32 1, 1
        %s746 = ssub.s32 %s745, 1
        loop: start=0, step=1, limit=1
        $region337: #{tpu_custom_call.1} parent=335 // loop_pre_header
          _
        $region338: #{tpu_custom_call.1} parent=335 // loop_header
          %s748 = sphi 0, %s752
          %p749 = scmp.ge.s32.totalorder %s748, 1
          %s753 = sphi %s279, %s279
          %s754 = sphi %s735, %s735
        $region339: #{tpu_custom_call.1} parent=335 // loop_header_branch
          %751 = sbr.rel (%p749) target = $region343
        $region340: #{tpu_custom_call.1} parent=335 // loop_body
          %v755 = vld [vmem:[%s753] sm:%s746]
          %756 = vst [vmem:[%s754] sm:%s746] %v755
        $region341: #{tpu_custom_call.1} parent=335 // loop_footer
          %s752 = sadd.s32 1, %s748
        $region342: #{tpu_custom_call.1} parent=335 // loop_footer_branch
          %747 = sbr.rel target = $region338
        $region343: #{tpu_custom_call.1} parent=335 // loop_exit
          _
      $region336: #{tpu_custom_call.1} parent=27 // pred_fallthru
        _
      // Predicated region
      $region355: #{tpu_custom_call.1} parent=27 // pred_check
        _
      $region356: #{tpu_custom_call.1} parent=27 // pred_check_branch
        %781 = sbr.rel (0) target = $region358
      $region357: #{tpu_custom_call.1} parent=27 // pred_region
        %782 = vsyncadd %s736, 16
      $region358: #{tpu_custom_call.1} parent=27 // pred_fallthru
        _
      %s783 = scalar_lea.vmem %s5, %s173
      %s784 = scalar_lea.sflag [#allocation4], 3
      %p786 = scmp.lt.u32.totalorder 1, 8
      %p787 = pneg %p786
      // Predicated region
      $region359: #{tpu_custom_call.1} parent=27 // pred_check
        _
      $region360: #{tpu_custom_call.1} parent=27 // pred_check_branch
        %789 = sbr.rel (%p786) target = $region362
      $region361: #{tpu_custom_call.1} parent=27 // pred_region
        %s805 = sand.u32 1, 7
        %p806 = scmp.eq.s32.totalorder %s805, 0
        %p807 = pneg %p806
        // Predicated region
        $region374: #{tpu_custom_call.1} parent=361 // pred_check
          _
        $region375: #{tpu_custom_call.1} parent=361 // pred_check_branch
          %809 = sbr.rel (%p806) target = $region377
        $region376: #{tpu_custom_call.1} parent=361 // pred_region
          %s810 = sand.u32 1, 7
          %s811 = ssub.s32 1, %s810
          %s812 = scalar_lea.vmem %s328, %s811 [#allocation2]
          %s813 = ssub.s32 1, %s810
          %s814 = scalar_lea.vmem %s783, %s813
          %s815 = sshll.u32 1, %s810
          %s816 = ssub.s32 %s815, 1
          loop: start=0, step=1, limit=1
          $region378: #{tpu_custom_call.1} parent=376 // loop_pre_header
            _
          $region379: #{tpu_custom_call.1} parent=376 // loop_header
            %s818 = sphi 0, %s822
            %p819 = scmp.ge.s32.totalorder %s818, 1
            %s823 = sphi %s812, %s812
            %s824 = sphi %s814, %s814
          $region380: #{tpu_custom_call.1} parent=376 // loop_header_branch
            %821 = sbr.rel (%p819) target = $region384
          $region381: #{tpu_custom_call.1} parent=376 // loop_body
            %v825 = vld [vmem:[%s823] sm:%s816]
            %826 = vst [vmem:[%s824] sm:%s816] %v825
          $region382: #{tpu_custom_call.1} parent=376 // loop_footer
            %s822 = sadd.s32 1, %s818
          $region383: #{tpu_custom_call.1} parent=376 // loop_footer_branch
            %817 = sbr.rel target = $region379
          $region384: #{tpu_custom_call.1} parent=376 // loop_exit
            _
        $region377: #{tpu_custom_call.1} parent=361 // pred_fallthru
          _
      $region362: #{tpu_custom_call.1} parent=27 // pred_fallthru
        _
      // Predicated region
      $region363: #{tpu_custom_call.1} parent=27 // pred_check
        %p790 = pneg %p786
      $region364: #{tpu_custom_call.1} parent=27 // pred_check_branch
        %792 = sbr.rel (%p790) target = $region366
      $region365: #{tpu_custom_call.1} parent=27 // pred_region
        %s793 = sshll.u32 1, 1
        %s794 = ssub.s32 %s793, 1
        loop: start=0, step=1, limit=1
        $region367: #{tpu_custom_call.1} parent=365 // loop_pre_header
          _
        $region368: #{tpu_custom_call.1} parent=365 // loop_header
          %s796 = sphi 0, %s800
          %p797 = scmp.ge.s32.totalorder %s796, 1
          %s801 = sphi %s328, %s328
          %s802 = sphi %s783, %s783
        $region369: #{tpu_custom_call.1} parent=365 // loop_header_branch
          %799 = sbr.rel (%p797) target = $region373
        $region370: #{tpu_custom_call.1} parent=365 // loop_body
          %v803 = vld [vmem:[%s801] sm:%s794]
          %804 = vst [vmem:[%s802] sm:%s794] %v803
        $region371: #{tpu_custom_call.1} parent=365 // loop_footer
          %s800 = sadd.s32 1, %s796
        $region372: #{tpu_custom_call.1} parent=365 // loop_footer_branch
          %795 = sbr.rel target = $region368
        $region373: #{tpu_custom_call.1} parent=365 // loop_exit
          _
      $region366: #{tpu_custom_call.1} parent=27 // pred_fallthru
        _
      // Predicated region
      $region385: #{tpu_custom_call.1} parent=27 // pred_check
        _
      $region386: #{tpu_custom_call.1} parent=27 // pred_check_branch
        %829 = sbr.rel (0) target = $region388
      $region387: #{tpu_custom_call.1} parent=27 // pred_region
        %830 = vsyncadd %s784, 16
      $region388: #{tpu_custom_call.1} parent=27 // pred_fallthru
        _
      %s831 = scalar_lea.vmem %s5, %s175
      %s832 = scalar_lea.sflag [#allocation4], 4
      %p834 = scmp.lt.u32.totalorder 1, 8
      %p835 = pneg %p834
      // Predicated region
      $region389: #{tpu_custom_call.1} parent=27 // pred_check
        _
      $region390: #{tpu_custom_call.1} parent=27 // pred_check_branch
        %837 = sbr.rel (%p834) target = $region392
      $region391: #{tpu_custom_call.1} parent=27 // pred_region
        %s853 = sand.u32 1, 7
        %p854 = scmp.eq.s32.totalorder %s853, 0
        %p855 = pneg %p854
        // Predicated region
        $region404: #{tpu_custom_call.1} parent=391 // pred_check
          _
        $region405: #{tpu_custom_call.1} parent=391 // pred_check_branch
          %857 = sbr.rel (%p854) target = $region407
        $region406: #{tpu_custom_call.1} parent=391 // pred_region
          %s858 = sand.u32 1, 7
          %s859 = ssub.s32 1, %s858
          %s860 = scalar_lea.vmem %s377, %s859 [#allocation2]
          %s861 = ssub.s32 1, %s858
          %s862 = scalar_lea.vmem %s831, %s861
          %s863 = sshll.u32 1, %s858
          %s864 = ssub.s32 %s863, 1
          loop: start=0, step=1, limit=1
          $region408: #{tpu_custom_call.1} parent=406 // loop_pre_header
            _
          $region409: #{tpu_custom_call.1} parent=406 // loop_header
            %s866 = sphi 0, %s870
            %p867 = scmp.ge.s32.totalorder %s866, 1
            %s871 = sphi %s860, %s860
            %s872 = sphi %s862, %s862
          $region410: #{tpu_custom_call.1} parent=406 // loop_header_branch
            %869 = sbr.rel (%p867) target = $region414
          $region411: #{tpu_custom_call.1} parent=406 // loop_body
            %v873 = vld [vmem:[%s871] sm:%s864]
            %874 = vst [vmem:[%s872] sm:%s864] %v873
          $region412: #{tpu_custom_call.1} parent=406 // loop_footer
            %s870 = sadd.s32 1, %s866
          $region413: #{tpu_custom_call.1} parent=406 // loop_footer_branch
            %865 = sbr.rel target = $region409
          $region414: #{tpu_custom_call.1} parent=406 // loop_exit
            _
        $region407: #{tpu_custom_call.1} parent=391 // pred_fallthru
          _
      $region392: #{tpu_custom_call.1} parent=27 // pred_fallthru
        _
      // Predicated region
      $region393: #{tpu_custom_call.1} parent=27 // pred_check
        %p838 = pneg %p834
      $region394: #{tpu_custom_call.1} parent=27 // pred_check_branch
        %840 = sbr.rel (%p838) target = $region396
      $region395: #{tpu_custom_call.1} parent=27 // pred_region
        %s841 = sshll.u32 1, 1
        %s842 = ssub.s32 %s841, 1
        loop: start=0, step=1, limit=1
        $region397: #{tpu_custom_call.1} parent=395 // loop_pre_header
          _
        $region398: #{tpu_custom_call.1} parent=395 // loop_header
          %s844 = sphi 0, %s848
          %p845 = scmp.ge.s32.totalorder %s844, 1
          %s849 = sphi %s377, %s377
          %s850 = sphi %s831, %s831
        $region399: #{tpu_custom_call.1} parent=395 // loop_header_branch
          %847 = sbr.rel (%p845) target = $region403
        $region400: #{tpu_custom_call.1} parent=395 // loop_body
          %v851 = vld [vmem:[%s849] sm:%s842]
          %852 = vst [vmem:[%s850] sm:%s842] %v851
        $region401: #{tpu_custom_call.1} parent=395 // loop_footer
          %s848 = sadd.s32 1, %s844
        $region402: #{tpu_custom_call.1} parent=395 // loop_footer_branch
          %843 = sbr.rel target = $region398
        $region403: #{tpu_custom_call.1} parent=395 // loop_exit
          _
      $region396: #{tpu_custom_call.1} parent=27 // pred_fallthru
        _
      // Predicated region
      $region415: #{tpu_custom_call.1} parent=27 // pred_check
        _
      $region416: #{tpu_custom_call.1} parent=27 // pred_check_branch
        %877 = sbr.rel (0) target = $region418
      $region417: #{tpu_custom_call.1} parent=27 // pred_region
        %878 = vsyncadd %s832, 16
      $region418: #{tpu_custom_call.1} parent=27 // pred_fallthru
        _
      %s879 = scalar_lea.vmem %s5, %s177
      %s880 = scalar_lea.sflag [#allocation4], 5
      %p882 = scmp.lt.u32.totalorder 1, 8
      %p883 = pneg %p882
      // Predicated region
      $region419: #{tpu_custom_call.1} parent=27 // pred_check
        _
      $region420: #{tpu_custom_call.1} parent=27 // pred_check_branch
        %885 = sbr.rel (%p882) target = $region422
      $region421: #{tpu_custom_call.1} parent=27 // pred_region
        %s901 = sand.u32 1, 7
        %p902 = scmp.eq.s32.totalorder %s901, 0
        %p903 = pneg %p902
        // Predicated region
        $region434: #{tpu_custom_call.1} parent=421 // pred_check
          _
        $region435: #{tpu_custom_call.1} parent=421 // pred_check_branch
          %905 = sbr.rel (%p902) target = $region437
        $region436: #{tpu_custom_call.1} parent=421 // pred_region
          %s906 = sand.u32 1, 7
          %s907 = ssub.s32 1, %s906
          %s908 = scalar_lea.vmem %s426, %s907 [#allocation2]
          %s909 = ssub.s32 1, %s906
          %s910 = scalar_lea.vmem %s879, %s909
          %s911 = sshll.u32 1, %s906
          %s912 = ssub.s32 %s911, 1
          loop: start=0, step=1, limit=1
          $region438: #{tpu_custom_call.1} parent=436 // loop_pre_header
            _
          $region439: #{tpu_custom_call.1} parent=436 // loop_header
            %s914 = sphi 0, %s918
            %p915 = scmp.ge.s32.totalorder %s914, 1
            %s919 = sphi %s908, %s908
            %s920 = sphi %s910, %s910
          $region440: #{tpu_custom_call.1} parent=436 // loop_header_branch
            %917 = sbr.rel (%p915) target = $region444
          $region441: #{tpu_custom_call.1} parent=436 // loop_body
            %v921 = vld [vmem:[%s919] sm:%s912]
            %922 = vst [vmem:[%s920] sm:%s912] %v921
          $region442: #{tpu_custom_call.1} parent=436 // loop_footer
            %s918 = sadd.s32 1, %s914
          $region443: #{tpu_custom_call.1} parent=436 // loop_footer_branch
            %913 = sbr.rel target = $region439
          $region444: #{tpu_custom_call.1} parent=436 // loop_exit
            _
        $region437: #{tpu_custom_call.1} parent=421 // pred_fallthru
          _
      $region422: #{tpu_custom_call.1} parent=27 // pred_fallthru
        _
      // Predicated region
      $region423: #{tpu_custom_call.1} parent=27 // pred_check
        %p886 = pneg %p882
      $region424: #{tpu_custom_call.1} parent=27 // pred_check_branch
        %888 = sbr.rel (%p886) target = $region426
      $region425: #{tpu_custom_call.1} parent=27 // pred_region
        %s889 = sshll.u32 1, 1
        %s890 = ssub.s32 %s889, 1
        loop: start=0, step=1, limit=1
        $region427: #{tpu_custom_call.1} parent=425 // loop_pre_header
          _
        $region428: #{tpu_custom_call.1} parent=425 // loop_header
          %s892 = sphi 0, %s896
          %p893 = scmp.ge.s32.totalorder %s892, 1
          %s897 = sphi %s426, %s426
          %s898 = sphi %s879, %s879
        $region429: #{tpu_custom_call.1} parent=425 // loop_header_branch
          %895 = sbr.rel (%p893) target = $region433
        $region430: #{tpu_custom_call.1} parent=425 // loop_body
          %v899 = vld [vmem:[%s897] sm:%s890]
          %900 = vst [vmem:[%s898] sm:%s890] %v899
        $region431: #{tpu_custom_call.1} parent=425 // loop_footer
          %s896 = sadd.s32 1, %s892
        $region432: #{tpu_custom_call.1} parent=425 // loop_footer_branch
          %891 = sbr.rel target = $region428
        $region433: #{tpu_custom_call.1} parent=425 // loop_exit
          _
      $region426: #{tpu_custom_call.1} parent=27 // pred_fallthru
        _
      // Predicated region
      $region445: #{tpu_custom_call.1} parent=27 // pred_check
        _
      $region446: #{tpu_custom_call.1} parent=27 // pred_check_branch
        %925 = sbr.rel (0) target = $region448
      $region447: #{tpu_custom_call.1} parent=27 // pred_region
        %926 = vsyncadd %s880, 16
      $region448: #{tpu_custom_call.1} parent=27 // pred_fallthru
        _
      %s927 = scalar_lea.vmem %s5, %s179
      %s928 = scalar_lea.sflag [#allocation4], 6
      %p930 = scmp.lt.u32.totalorder 1, 8
      %p931 = pneg %p930
      // Predicated region
      $region449: #{tpu_custom_call.1} parent=27 // pred_check
        _
      $region450: #{tpu_custom_call.1} parent=27 // pred_check_branch
        %933 = sbr.rel (%p930) target = $region452
      $region451: #{tpu_custom_call.1} parent=27 // pred_region
        %s949 = sand.u32 1, 7
        %p950 = scmp.eq.s32.totalorder %s949, 0
        %p951 = pneg %p950
        // Predicated region
        $region464: #{tpu_custom_call.1} parent=451 // pred_check
          _
        $region465: #{tpu_custom_call.1} parent=451 // pred_check_branch
          %953 = sbr.rel (%p950) target = $region467
        $region466: #{tpu_custom_call.1} parent=451 // pred_region
          %s954 = sand.u32 1, 7
          %s955 = ssub.s32 1, %s954
          %s956 = scalar_lea.vmem %s475, %s955 [#allocation2]
          %s957 = ssub.s32 1, %s954
          %s958 = scalar_lea.vmem %s927, %s957
          %s959 = sshll.u32 1, %s954
          %s960 = ssub.s32 %s959, 1
          loop: start=0, step=1, limit=1
          $region468: #{tpu_custom_call.1} parent=466 // loop_pre_header
            _
          $region469: #{tpu_custom_call.1} parent=466 // loop_header
            %s962 = sphi 0, %s966
            %p963 = scmp.ge.s32.totalorder %s962, 1
            %s967 = sphi %s956, %s956
            %s968 = sphi %s958, %s958
          $region470: #{tpu_custom_call.1} parent=466 // loop_header_branch
            %965 = sbr.rel (%p963) target = $region474
          $region471: #{tpu_custom_call.1} parent=466 // loop_body
            %v969 = vld [vmem:[%s967] sm:%s960]
            %970 = vst [vmem:[%s968] sm:%s960] %v969
          $region472: #{tpu_custom_call.1} parent=466 // loop_footer
            %s966 = sadd.s32 1, %s962
          $region473: #{tpu_custom_call.1} parent=466 // loop_footer_branch
            %961 = sbr.rel target = $region469
          $region474: #{tpu_custom_call.1} parent=466 // loop_exit
            _
        $region467: #{tpu_custom_call.1} parent=451 // pred_fallthru
          _
      $region452: #{tpu_custom_call.1} parent=27 // pred_fallthru
        _
      // Predicated region
      $region453: #{tpu_custom_call.1} parent=27 // pred_check
        %p934 = pneg %p930
      $region454: #{tpu_custom_call.1} parent=27 // pred_check_branch
        %936 = sbr.rel (%p934) target = $region456
      $region455: #{tpu_custom_call.1} parent=27 // pred_region
        %s937 = sshll.u32 1, 1
        %s938 = ssub.s32 %s937, 1
        loop: start=0, step=1, limit=1
        $region457: #{tpu_custom_call.1} parent=455 // loop_pre_header
          _
        $region458: #{tpu_custom_call.1} parent=455 // loop_header
          %s940 = sphi 0, %s944
          %p941 = scmp.ge.s32.totalorder %s940, 1
          %s945 = sphi %s475, %s475
          %s946 = sphi %s927, %s927
        $region459: #{tpu_custom_call.1} parent=455 // loop_header_branch
          %943 = sbr.rel (%p941) target = $region463
        $region460: #{tpu_custom_call.1} parent=455 // loop_body
          %v947 = vld [vmem:[%s945] sm:%s938]
          %948 = vst [vmem:[%s946] sm:%s938] %v947
        $region461: #{tpu_custom_call.1} parent=455 // loop_footer
          %s944 = sadd.s32 1, %s940
        $region462: #{tpu_custom_call.1} parent=455 // loop_footer_branch
          %939 = sbr.rel target = $region458
        $region463: #{tpu_custom_call.1} parent=455 // loop_exit
          _
      $region456: #{tpu_custom_call.1} parent=27 // pred_fallthru
        _
      // Predicated region
      $region475: #{tpu_custom_call.1} parent=27 // pred_check
        _
      $region476: #{tpu_custom_call.1} parent=27 // pred_check_branch
        %973 = sbr.rel (0) target = $region478
      $region477: #{tpu_custom_call.1} parent=27 // pred_region
        %974 = vsyncadd %s928, 16
      $region478: #{tpu_custom_call.1} parent=27 // pred_fallthru
        _
      %s975 = scalar_lea.vmem %s5, %s181
      %s976 = scalar_lea.sflag [#allocation4], 7
      %p978 = scmp.lt.u32.totalorder 1, 8
      %p979 = pneg %p978
      // Predicated region
      $region479: #{tpu_custom_call.1} parent=27 // pred_check
        _
      $region480: #{tpu_custom_call.1} parent=27 // pred_check_branch
        %981 = sbr.rel (%p978) target = $region482
      $region481: #{tpu_custom_call.1} parent=27 // pred_region
        %s997 = sand.u32 1, 7
        %p998 = scmp.eq.s32.totalorder %s997, 0
        %p999 = pneg %p998
        // Predicated region
        $region494: #{tpu_custom_call.1} parent=481 // pred_check
          _
        $region495: #{tpu_custom_call.1} parent=481 // pred_check_branch
          %1001 = sbr.rel (%p998) target = $region497
        $region496: #{tpu_custom_call.1} parent=481 // pred_region
          %s1002 = sand.u32 1, 7
          %s1003 = ssub.s32 1, %s1002
          %s1004 = scalar_lea.vmem %s524, %s1003 [#allocation2]
          %s1005 = ssub.s32 1, %s1002
          %s1006 = scalar_lea.vmem %s975, %s1005
          %s1007 = sshll.u32 1, %s1002
          %s1008 = ssub.s32 %s1007, 1
          loop: start=0, step=1, limit=1
          $region498: #{tpu_custom_call.1} parent=496 // loop_pre_header
            _
          $region499: #{tpu_custom_call.1} parent=496 // loop_header
            %s1010 = sphi 0, %s1014
            %p1011 = scmp.ge.s32.totalorder %s1010, 1
            %s1015 = sphi %s1004, %s1004
            %s1016 = sphi %s1006, %s1006
          $region500: #{tpu_custom_call.1} parent=496 // loop_header_branch
            %1013 = sbr.rel (%p1011) target = $region504
          $region501: #{tpu_custom_call.1} parent=496 // loop_body
            %v1017 = vld [vmem:[%s1015] sm:%s1008]
            %1018 = vst [vmem:[%s1016] sm:%s1008] %v1017
          $region502: #{tpu_custom_call.1} parent=496 // loop_footer
            %s1014 = sadd.s32 1, %s1010
          $region503: #{tpu_custom_call.1} parent=496 // loop_footer_branch
            %1009 = sbr.rel target = $region499
          $region504: #{tpu_custom_call.1} parent=496 // loop_exit
            _
        $region497: #{tpu_custom_call.1} parent=481 // pred_fallthru
          _
      $region482: #{tpu_custom_call.1} parent=27 // pred_fallthru
        _
      // Predicated region
      $region483: #{tpu_custom_call.1} parent=27 // pred_check
        %p982 = pneg %p978
      $region484: #{tpu_custom_call.1} parent=27 // pred_check_branch
        %984 = sbr.rel (%p982) target = $region486
      $region485: #{tpu_custom_call.1} parent=27 // pred_region
        %s985 = sshll.u32 1, 1
        %s986 = ssub.s32 %s985, 1
        loop: start=0, step=1, limit=1
        $region487: #{tpu_custom_call.1} parent=485 // loop_pre_header
          _
        $region488: #{tpu_custom_call.1} parent=485 // loop_header
          %s988 = sphi 0, %s992
          %p989 = scmp.ge.s32.totalorder %s988, 1
          %s993 = sphi %s524, %s524
          %s994 = sphi %s975, %s975
        $region489: #{tpu_custom_call.1} parent=485 // loop_header_branch
          %991 = sbr.rel (%p989) target = $region493
        $region490: #{tpu_custom_call.1} parent=485 // loop_body
          %v995 = vld [vmem:[%s993] sm:%s986]
          %996 = vst [vmem:[%s994] sm:%s986] %v995
        $region491: #{tpu_custom_call.1} parent=485 // loop_footer
          %s992 = sadd.s32 1, %s988
        $region492: #{tpu_custom_call.1} parent=485 // loop_footer_branch
          %987 = sbr.rel target = $region488
        $region493: #{tpu_custom_call.1} parent=485 // loop_exit
          _
      $region486: #{tpu_custom_call.1} parent=27 // pred_fallthru
        _
      // Predicated region
      $region505: #{tpu_custom_call.1} parent=27 // pred_check
        _
      $region506: #{tpu_custom_call.1} parent=27 // pred_check_branch
        %1021 = sbr.rel (0) target = $region508
      $region507: #{tpu_custom_call.1} parent=27 // pred_region
        %1022 = vsyncadd %s976, 16
      $region508: #{tpu_custom_call.1} parent=27 // pred_fallthru
        _
      %s1023 = sshll.u32 %s572, 4
      %1024 = dma.done [#allocation4], %s1023
      %s1025 = sshll.u32 %s572, 4
      %1026 = dma.done %s688, %s1025
      %s1027 = sshll.u32 %s572, 4
      %1028 = dma.done %s736, %s1027
      %s1029 = sshll.u32 %s572, 4
      %1030 = dma.done %s784, %s1029
      %s1031 = sshll.u32 %s572, 4
      %1032 = dma.done %s832, %s1031
      %s1033 = sshll.u32 %s572, 4
      %1034 = dma.done %s880, %s1033
      %s1035 = sshll.u32 %s572, 4
      %1036 = dma.done %s928, %s1035
      %s1037 = sshll.u32 %s572, 4
      %1038 = dma.done %s976, %s1037
      %p1039 = scmp.lt.s32.totalorder %s23, 1
      %s1040 = scalar_select %p1039, %s23, 1
      %s1041 = smul.addr %s1040, 8
      %s1042 = scalar_lea.vmem %s4, %s1041
      // Predicated region
      $region509: #{tpu_custom_call.1} parent=27 // pred_check
        %p1043 = pneg %p93
      $region510: #{tpu_custom_call.1} parent=27 // pred_check_branch
        %1045 = sbr.rel (%p1043) target = $region512
      $region511: #{tpu_custom_call.1} parent=27 // pred_region
        _
      $region512: #{tpu_custom_call.1} parent=27 // pred_fallthru
        _
    $region28: #{tpu_custom_call.1} parent=5 // pred_fallthru
      _
    %p1046 = scmp.le.s32.totalorder 2, %s18
    // Predicated region
    $region513: #{tpu_custom_call.1} parent=5 // pred_check
      %p1047 = pneg %p1046
    $region514: #{tpu_custom_call.1} parent=5 // pred_check_branch
      %1049 = sbr.rel (%p1047) target = $region516
    $region515: #{tpu_custom_call.1} parent=5 // pred_region
      %s1050 = ssub.s32 %s18, 2
      // Predicated region
      $region517: #{tpu_custom_call.1} parent=515 // pred_check
        %p1051 = pneg %p99
      $region518: #{tpu_custom_call.1} parent=515 // pred_check_branch
        %1053 = sbr.rel (%p1051) target = $region520
      $region519: #{tpu_custom_call.1} parent=515 // pred_region
        %p1054 = scmp.lt.s32.totalorder %s24, 1
        %s1055 = scalar_select %p1054, %s24, 1
        %s1056 = smul.addr %s1055, 8
        %s1057 = scalar_lea.vmem %s4, %s1056
      $region520: #{tpu_custom_call.1} parent=515 // pred_fallthru
        _
    $region516: #{tpu_custom_call.1} parent=5 // pred_fallthru
      _
  $region6: #{tpu_custom_call.1} parent=0 // loop_footer
    %s22 = sadd.s32 1, %s18
  $region7: #{tpu_custom_call.1} parent=0 // loop_footer_branch
    %17 = sbr.rel target = $region3
  $region8: #{tpu_custom_call.1} parent=0 // loop_exit
    _
  %1058 = vsyncmov [#allocation3]
  %s1059 = vpop.sfrf %1058
  %p1060 = scmp.eq.s32.totalorder %s1059, 0
  %p1061 = pneg %p1060
  %1063 = shalt.err (%p1061)
  %s1064 = scalar_lea.sflag [#allocation3], 1
  %1065 = vsyncmov %s1064
  %s1066 = vpop.sfrf %1065
  %p1067 = scmp.eq.s32.totalorder %s1066, 0
  %p1068 = pneg %p1067
  %1070 = shalt.err (%p1068)
  %s1071 = scalar_lea.sflag [#allocation3], 2
  %1072 = vsyncmov %s1071
  %s1073 = vpop.sfrf %1072
  %p1074 = scmp.eq.s32.totalorder %s1073, 0
  %p1075 = pneg %p1074
  %1077 = shalt.err (%p1075)
  %s1078 = scalar_lea.sflag [#allocation3], 3
  %1079 = vsyncmov %s1078
  %s1080 = vpop.sfrf %1079
  %p1081 = scmp.eq.s32.totalorder %s1080, 0
  %p1082 = pneg %p1081
  %1084 = shalt.err (%p1082)
  %s1085 = scalar_lea.sflag [#allocation3], 4
  %1086 = vsyncmov %s1085
  %s1087 = vpop.sfrf %1086
  %p1088 = scmp.eq.s32.totalorder %s1087, 0
  %p1089 = pneg %p1088
  %1091 = shalt.err (%p1089)
  %s1092 = scalar_lea.sflag [#allocation3], 5
  %1093 = vsyncmov %s1092
  %s1094 = vpop.sfrf %1093
  %p1095 = scmp.eq.s32.totalorder %s1094, 0
  %p1096 = pneg %p1095
  %1098 = shalt.err (%p1096)
  %s1099 = scalar_lea.sflag [#allocation3], 6
  %1100 = vsyncmov %s1099
  %s1101 = vpop.sfrf %1100
  %p1102 = scmp.eq.s32.totalorder %s1101, 0
  %p1103 = pneg %p1102
  %1105 = shalt.err (%p1103)
  %s1106 = scalar_lea.sflag [#allocation3], 7
  %1107 = vsyncmov %s1106
  %s1108 = vpop.sfrf %1107
  %p1109 = scmp.eq.s32.totalorder %s1108, 0
  %p1110 = pneg %p1109
  %1112 = shalt.err (%p1110)
  %1113 = vsyncmov [#allocation4]
  %s1114 = vpop.sfrf %1113
  %p1115 = scmp.eq.s32.totalorder %s1114, 0
  %p1116 = pneg %p1115
  %1118 = shalt.err (%p1116)
  %s1119 = scalar_lea.sflag [#allocation4], 1
  %1120 = vsyncmov %s1119
  %s1121 = vpop.sfrf %1120
  %p1122 = scmp.eq.s32.totalorder %s1121, 0
  %p1123 = pneg %p1122
  %1125 = shalt.err (%p1123)
  %s1126 = scalar_lea.sflag [#allocation4], 2
  %1127 = vsyncmov %s1126
  %s1128 = vpop.sfrf %1127
  %p1129 = scmp.eq.s32.totalorder %s1128, 0
  %p1130 = pneg %p1129
  %1132 = shalt.err (%p1130)
  %s1133 = scalar_lea.sflag [#allocation4], 3
  %1134 = vsyncmov %s1133
  %s1135 = vpop.sfrf %1134
  %p1136 = scmp.eq.s32.totalorder %s1135, 0
  %p1137 = pneg %p1136
  %1139 = shalt.err (%p1137)
  %s1140 = scalar_lea.sflag [#allocation4], 4
  %1141 = vsyncmov %s1140
  %s1142 = vpop.sfrf %1141
  %p1143 = scmp.eq.s32.totalorder %s1142, 0
  %p1144 = pneg %p1143
  %1146 = shalt.err (%p1144)
  %s1147 = scalar_lea.sflag [#allocation4], 5
  %1148 = vsyncmov %s1147
  %s1149 = vpop.sfrf %1148
  %p1150 = scmp.eq.s32.totalorder %s1149, 0
  %p1151 = pneg %p1150
  %1153 = shalt.err (%p1151)
  %s1154 = scalar_lea.sflag [#allocation4], 6
  %1155 = vsyncmov %s1154
  %s1156 = vpop.sfrf %1155
  %p1157 = scmp.eq.s32.totalorder %s1156, 0
  %p1158 = pneg %p1157
  %1160 = shalt.err (%p1158)
  %s1161 = scalar_lea.sflag [#allocation4], 7
  %1162 = vsyncmov %s1161
  %s1163 = vpop.sfrf %1162
  %p1164 = scmp.eq.s32.totalorder %s1163, 0
  %p1165 = pneg %p1164
  %1167 = shalt.err (%p1165)

</llo_original>
